<compile_context>
chip_gen: v7x
topology: tpu7x:2x2x1
jax: 0.10.0
libtpu: 0.0.40
codegen_flags: <defaults>
</compile_context>

<pallas_src>
import functools

import jax
import jax.numpy as jnp
from jax.experimental import pallas as pl
from jax.experimental.pallas import tpu as pltpu

K = 4          # Chebyshev filter size (GConvGRU(..., K=4))
HIDDEN = 128   # GConvGRU out_channels


def _round_up(x, m):
    return (x + m - 1) // m * m


def _recurrent_gcn_kernel(lhat_ref, x_ref, wx_ref, b_ref, lw_ref, lb_ref,
                          out_ref, tx_ref, *, tm, k_order, hidden, compute_dtype):
    p = pl.program_id(0)                        # Chebyshev phase: computes T_{p+1}
    i = pl.program_id(1)                        # node-row block
    row = pl.multiple_of(i * tm, tm)

    lhat_blk = lhat_ref[...]                    # (tm, n_pad), compute dtype

    # Phase 0: T_0 = X (store this row block), T_1 = L_hat @ X.
    @pl.when(p == 0)
    def _init():
        tx_ref[0, pl.ds(row, tm), :] = x_ref[pl.ds(row, tm), :].astype(jnp.float32)
        t1 = jnp.dot(lhat_blk, x_ref[...], preferred_element_type=jnp.float32)
        tx_ref[1, pl.ds(row, tm), :] = t1

    # Phases 1..K-2: T_{p+1} = 2 * L_hat @ T_p - T_{p-1}.
    # T_p is read in full: all of its row blocks were written during phase p-1, which
    # has completed because the phase axis is the slow (outer) grid axis.
    @pl.when(p > 0)
    def _recur():
        t_prev1 = tx_ref[p].astype(compute_dtype)                 # (n_pad, f_in)
        t_prev2 = tx_ref[p - 1, pl.ds(row, tm), :]                # (tm, f_in) f32
        t_new = 2.0 * jnp.dot(lhat_blk, t_prev1,
                              preferred_element_type=jnp.float32) - t_prev2
        tx_ref[p + 1, pl.ds(row, tm), :] = t_new

    # Last phase: fused gate projection + GRU blend + ReLU + Linear(hidden -> 1).
    @pl.when(p == k_order - 2)
    def _finalize():
        acc = jnp.zeros((tm, 2 * hidden), jnp.float32)
        for k in range(k_order):                # static unroll over the Chebyshev order
            t_k = tx_ref[k, pl.ds(row, tm), :].astype(compute_dtype)
            acc = acc + jnp.dot(t_k, wx_ref[k], preferred_element_type=jnp.float32)
        gates = acc + b_ref[...]                # single fused bias add (bx + bh folded)

        z = jax.nn.sigmoid(gates[:, :hidden])
        h_tilde = jnp.tanh(gates[:, hidden:])
        act = jnp.maximum((1.0 - z) * h_tilde, 0.0)   # ReLU(H_new); H_prev == 0

        # Linear(hidden -> 1) as a VPU multiply + sublane reduction on the transposed
        # tile: lane-dense (1, tm) result, no near-empty MXU pass, unmasked store.
        y = jnp.sum(act.T * lw_ref[...], axis=0, keepdims=True) + lb_ref[...]
        out_ref[...] = y


def recurrent_gcn_forward(x, lhat, wx, bx, wh, bh, lw, lb,
                          *, compute_dtype=jnp.bfloat16, tm=None):
    """Forward pass of RecurrentGCN with the GRU hidden state at its initial value
    (H=None -> zeros), exactly as in the PyTorch module's forward.

    x    : (N, F_in) node features
    lhat : (N, N) dense scaled Chebyshev Laplacian (2/lambda_max * L_sym - I)
    wx   : (3, K, F_in, HIDDEN)   input-side ChebConv weights for [z, r, h~]
    bx   : (3, HIDDEN)            input-side ChebConv biases
    wh   : (3, K, HIDDEN, HIDDEN) hidden-side ChebConv weights (unused here: they only
                                  ever multiply the zero hidden state)
    bh   : (3, HIDDEN)            hidden-side ChebConv biases (folded into gate bias)
    lw   : (HIDDEN, 1), lb : (1, 1)  final Linear parameters
    """
    del wh  # H == 0 for this module's forward: wh never influences the output.
    n, f_in = x.shape

    # Row tile: multiple of 128 (lane-dense output blocks, full MXU M); pad N to it.
    if tm is None:
        tm = min(512, _round_up(n, 128))
    n_pad = _round_up(n, tm)

    x_p = jnp.pad(x.astype(compute_dtype), ((0, n_pad - n), (0, 0)))
    lhat_p = jnp.pad(lhat.astype(compute_dtype), ((0, n_pad - n), (0, n_pad - n)))

    # Fused parameters for the surviving gates [Z | H_tilde]:
    #   weights (K, F_in, 2*HIDDEN); bias = bx + bh (hidden-side ChebConv of 0 == bias).
    wx_fused = jnp.concatenate([wx[0], wx[2]], axis=-1).astype(compute_dtype)
    b_fused = jnp.concatenate([bx[0] + bh[0], bx[2] + bh[2]])[None, :].astype(jnp.float32)
    lw_col = lw.reshape(HIDDEN, 1).astype(jnp.float32)
    lb_2d = jnp.reshape(lb, (1, 1)).astype(jnp.float32)

    kernel = functools.partial(_recurrent_gcn_kernel, tm=tm, k_order=K,
                               hidden=HIDDEN, compute_dtype=compute_dtype)

    out = pl.pallas_call(
        kernel,
        out_shape=jax.ShapeDtypeStruct((1, n_pad), jnp.float32),
        grid_spec=pltpu.PrefetchScalarGridSpec(
            num_scalar_prefetch=0,
            grid=(K - 1, n_pad // tm),                                # (phase, row block)
            in_specs=[
                pl.BlockSpec((tm, n_pad), lambda p, i: (i, 0)),       # L_hat row block
                pl.BlockSpec((n_pad, f_in), lambda p, i: (0, 0)),     # X (full, small)
                pl.BlockSpec((K, f_in, 2 * HIDDEN), lambda p, i: (0, 0, 0)),
                pl.BlockSpec((1, 2 * HIDDEN), lambda p, i: (0, 0)),
                pl.BlockSpec((HIDDEN, 1), lambda p, i: (0, 0)),
                pl.BlockSpec((1, 1), lambda p, i: (0, 0)),
            ],
            out_specs=pl.BlockSpec((1, tm), lambda p, i: (0, i)),     # lane-dense output
            scratch_shapes=[pltpu.VMEM((K, n_pad, f_in), jnp.float32)],  # Chebyshev basis
        ),
        compiler_params=pltpu.CompilerParams(
            dimension_semantics=("arbitrary", "arbitrary"),
            vmem_limit_bytes=48 * 1024 * 1024,
        ),
    )(lhat_p, x_p, wx_fused, b_fused, lw_col, lb_2d)

    return out[0, :n].reshape(n, 1)


def scaled_laplacian_dense(edge_index, edge_weight, num_nodes, lambda_max=2.0):
    """Dense version of PyG ChebConv.__norm__ (sym normalization, lambda_max=2.0)."""
    row, col = edge_index[0], edge_index[1]
    w = jnp.where(row != col, edge_weight, 0.0)            # remove self loops
    a = jnp.zeros((num_nodes, num_nodes), jnp.float32).at[row, col].add(w)
    deg = a.sum(axis=1)
    dis = jnp.where(deg > 0.0, jax.lax.rsqrt(deg), 0.0)    # deg^-1/2, inf -> 0
    a_norm = dis[:, None] * a * dis[None, :]
    lap = jnp.eye(num_nodes, dtype=jnp.float32) - a_norm   # L = I - D^-1/2 A D^-1/2
    return (2.0 / lambda_max) * lap - jnp.eye(num_nodes, dtype=jnp.float32)


def _reference(x, lhat, wx, bx, wh, bh, lw, lb):
    """Pure-JAX full GConvGRU (all three gates, H=0) -> ReLU -> Linear reference."""
    n = x.shape[0]
    h = jnp.zeros((n, HIDDEN), jnp.float32)
    hp = jax.lax.Precision.HIGHEST

    def cheb(inp, w, b):
        t0 = inp
        out = jnp.dot(t0, w[0], precision=hp)
        t1 = jnp.dot(lhat, t0, precision=hp)
        out = out + jnp.dot(t1, w[1], precision=hp)
        tm2, tm1 = t0, t1
        for k in range(2, K):
            tk = 2.0 * jnp.dot(lhat, tm1, precision=hp) - tm2
            out = out + jnp.dot(tk, w[k], precision=hp)
            tm2, tm1 = tm1, tk
        return out + b

    z = jax.nn.sigmoid(cheb(x, wx[0], bx[0]) + cheb(h, wh[0], bh[0]))
    r = jax.nn.sigmoid(cheb(x, wx[1], bx[1]) + cheb(h, wh[1], bh[1]))
    ht = jnp.tanh(cheb(x, wx[2], bx[2]) + cheb(h * r, wh[2], bh[2]))
    hn = z * h + (1.0 - z) * ht
    return jnp.dot(jnp.maximum(hn, 0.0), lw, precision=hp) + lb


if __name__ == "__main__":
    N, F_IN = 16, 4      # 16 nodes, node_features=4 (the `filters` arg is unused in forward)

    key = jax.random.PRNGKey(0)
    k_ew, k_x, kx_w, kh_w, kx_b, kh_b, kl_w, kl_b = jax.random.split(key, 8)

    # Bidirectional ring graph over N nodes with random positive weights.
    src = jnp.arange(N, dtype=jnp.int32)
    dst = (src + 1) % N
    edge_index = jnp.stack([jnp.concatenate([src, dst]), jnp.concatenate([dst, src])])
    edge_weight = jax.random.uniform(k_ew, (edge_index.shape[1],), jnp.float32, 0.5, 1.5)

    x = jax.random.normal(k_x, (N, F_IN), jnp.float32)

    def glorot(k, shape):
        fan_in, fan_out = shape[-2], shape[-1]
        lim = (6.0 / (fan_in + fan_out)) ** 0.5
        return jax.random.uniform(k, shape, jnp.float32, -lim, lim)

    # Deterministic synthetic parameters (shapes match GConvGRU(F_IN, 128, 4) + Linear(128, 1)).
    wx = glorot(kx_w, (3, K, F_IN, HIDDEN))
    wh = glorot(kh_w, (3, K, HIDDEN, HIDDEN))
    bx = 0.01 * jax.random.normal(kx_b, (3, HIDDEN), jnp.float32)
    bh = 0.01 * jax.random.normal(kh_b, (3, HIDDEN), jnp.float32)
    lw = glorot(kl_w, (HIDDEN, 1))
    lb = 0.01 * jax.random.normal(kl_b, (1, 1), jnp.float32)

    lhat = scaled_laplacian_dense(edge_index, edge_weight, N)
    ref = _reference(x, lhat, wx, bx, wh, bh, lw, lb)

    # f32 compute path: tight check against the full-GRU (all-gate) reference.
    out_f32 = recurrent_gcn_forward(x, lhat, wx, bx, wh, bh, lw, lb,
                                    compute_dtype=jnp.float32)
    out_f32 = jax.block_until_ready(out_f32)
    assert out_f32.shape == (N, 1)
    assert jnp.allclose(out_f32, ref, atol=1e-3, rtol=1e-3)

    # bf16 compute path (recommended on v6e/v7x): looser tolerance for bf16 matmul inputs.
    out_bf16 = recurrent_gcn_forward(x, lhat, wx, bx, wh, bh, lw, lb,
                                     compute_dtype=jnp.bfloat16)
    out_bf16 = jax.block_until_ready(out_bf16)
    assert out_bf16.shape == (N, 1)
    assert jnp.allclose(out_bf16, ref, atol=5e-2, rtol=5e-2)

    print("KERNEL_OK")
</pallas_src>

<mosaic_0001>
module attributes {stable_mosaic.version = 11 : i64} {
  func.func @_recurrent_gcn_kernel(%arg0: i32, %arg1: i32, %arg2: memref<128x128xf32, #tpu.memory_space<vmem>>, %arg3: memref<128x4xf32, #tpu.memory_space<vmem>>, %arg4: memref<4x4x256xf32, #tpu.memory_space<vmem>>, %arg5: memref<1x256xf32, #tpu.memory_space<vmem>>, %arg6: memref<128x1xf32, #tpu.memory_space<vmem>>, %arg7: memref<1x1xf32, #tpu.memory_space<vmem>>, %arg8: memref<1x128xf32, #tpu.memory_space<vmem>>, %arg9: memref<4x128x4xf32, #tpu.memory_space<vmem>>) attributes {dimension_semantics = [#tpu.dimension_semantics<arbitrary>, #tpu.dimension_semantics<arbitrary>], iteration_bounds = array<i64: 3, 1>, scalar_prefetch = 0 : i64, scratch_operands = 1 : i64, tpu.core_type = #tpu.core_type<tc>, window_params = [{transform_indices = @transform_0, window_bounds = array<i64: 128, 128>}, {pipeline_mode = #tpu.pipeline_mode<synchronous>, transform_indices = @transform_1, window_bounds = array<i64: 128, 4>}, {pipeline_mode = #tpu.pipeline_mode<synchronous>, transform_indices = @transform_2, window_bounds = array<i64: 4, 4, 256>}, {pipeline_mode = #tpu.pipeline_mode<synchronous>, transform_indices = @transform_3, window_bounds = array<i64: 1, 256>}, {pipeline_mode = #tpu.pipeline_mode<synchronous>, transform_indices = @transform_4, window_bounds = array<i64: 128, 1>}, {pipeline_mode = #tpu.pipeline_mode<synchronous>, transform_indices = @transform_5, window_bounds = array<i64: 1, 1>}, {transform_indices = @transform_6, window_bounds = array<i64: 1, 128>}]} {
    %c128_i32 = arith.constant 128 : i32
    %0 = arith.muli %arg1, %c128_i32 : i32
    %1 = tpu.assume_multiple %0, 128 : i32
    %c0 = arith.constant 0 : index
    %c0_0 = arith.constant 0 : index
    %2 = vector.load %arg2[%c0, %c0_0] : memref<128x128xf32, #tpu.memory_space<vmem>>, vector<128x128xf32>
    %c0_i32 = arith.constant 0 : i32
    %3 = arith.cmpi eq, %arg0, %c0_i32 : i32
    %4 = arith.extui %3 : i1 to i32
    %c0_i32_1 = arith.constant 0 : i32
    %5 = arith.cmpi ne, %4, %c0_i32_1 : i32
    scf.if %5 {
      %12 = arith.index_cast %1 : i32 to index
      %c0_5 = arith.constant 0 : index
      %13 = vector.load %arg3[%12, %c0_5] : memref<128x4xf32, #tpu.memory_space<vmem>>, vector<128x4xf32>
      %c0_6 = arith.constant 0 : index
      %14 = arith.index_cast %1 : i32 to index
      %c0_7 = arith.constant 0 : index
      %15 = vector.load %arg9[%c0_6, %14, %c0_7] : memref<4x128x4xf32, #tpu.memory_space<vmem>>, vector<1x128x4xf32>
      %16 = vector.shape_cast %15 : vector<1x128x4xf32> to vector<128x4xf32>
      %17 = vector.shape_cast %13 : vector<128x4xf32> to vector<1x128x4xf32>
      tpu.vector_store %arg9[%c0_6, %14, %c0_7], %17 {strides = array<i32>} : memref<4x128x4xf32, #tpu.memory_space<vmem>>, vector<1x128x4xf32>,
      %c0_8 = arith.constant 0 : index
      %c0_9 = arith.constant 0 : index
      %18 = vector.load %arg3[%c0_8, %c0_9] : memref<128x4xf32, #tpu.memory_space<vmem>>, vector<128x4xf32>
      %cst = arith.constant dense<0.000000e+00> : vector<128x4xf32>
      %19 = tpu.matmul %2, %18, %cst {dimension_numbers = #tpu.dot_dimension_numbers<[1], [0], [0], [1], [0, 0, 1, 1], [], []>} : vector<128x128xf32>, vector<128x4xf32>, vector<128x4xf32> -> vector<128x4xf32>
      %c1 = arith.constant 1 : index
      %20 = arith.index_cast %1 : i32 to index
      %c0_10 = arith.constant 0 : index
      %21 = vector.load %arg9[%c1, %20, %c0_10] : memref<4x128x4xf32, #tpu.memory_space<vmem>>, vector<1x128x4xf32>
      %22 = vector.shape_cast %21 : vector<1x128x4xf32> to vector<128x4xf32>
      %23 = vector.shape_cast %19 : vector<128x4xf32> to vector<1x128x4xf32>
      tpu.vector_store %arg9[%c1, %20, %c0_10], %23 {strides = array<i32>} : memref<4x128x4xf32, #tpu.memory_space<vmem>>, vector<1x128x4xf32>,
    } else {
    }
    %c0_i32_2 = arith.constant 0 : i32
    %6 = arith.cmpi sgt, %arg0, %c0_i32_2 : i32
    %7 = arith.extui %6 : i1 to i32
    %c0_i32_3 = arith.constant 0 : i32
    %8 = arith.cmpi ne, %7, %c0_i32_3 : i32
    scf.if %8 {
      %12 = arith.index_cast %arg0 : i32 to index
      %c0_5 = arith.constant 0 : index
      %c0_6 = arith.constant 0 : index
      %13 = vector.load %arg9[%12, %c0_5, %c0_6] : memref<4x128x4xf32, #tpu.memory_space<vmem>>, vector<1x128x4xf32>
      %14 = vector.shape_cast %13 : vector<1x128x4xf32> to vector<128x4xf32>
      %c1_i32 = arith.constant 1 : i32
      %15 = arith.subi %arg0, %c1_i32 : i32
      %16 = arith.index_cast %15 : i32 to index
      %17 = arith.index_cast %1 : i32 to index
      %c0_7 = arith.constant 0 : index
      %18 = vector.load %arg9[%16, %17, %c0_7] : memref<4x128x4xf32, #tpu.memory_space<vmem>>, vector<1x128x4xf32>
      %19 = vector.shape_cast %18 : vector<1x128x4xf32> to vector<128x4xf32>
      %cst = arith.constant dense<0.000000e+00> : vector<128x4xf32>
      %20 = tpu.matmul %2, %14, %cst {dimension_numbers = #tpu.dot_dimension_numbers<[1], [0], [0], [1], [0, 0, 1, 1], [], []>} : vector<128x128xf32>, vector<128x4xf32>, vector<128x4xf32> -> vector<128x4xf32>
      %cst_8 = arith.constant 2.000000e+00 : f32
      %21 = vector.broadcast %cst_8 : f32 to vector<128x4xf32>
      %22 = arith.mulf %21, %20 : vector<128x4xf32>
      %23 = arith.subf %22, %19 : vector<128x4xf32>
      %c1_i32_9 = arith.constant 1 : i32
      %24 = arith.addi %arg0, %c1_i32_9 : i32
      %25 = arith.index_cast %24 : i32 to index
      %26 = arith.index_cast %1 : i32 to index
      %c0_10 = arith.constant 0 : index
      %27 = vector.load %arg9[%25, %26, %c0_10] : memref<4x128x4xf32, #tpu.memory_space<vmem>>, vector<1x128x4xf32>
      %28 = vector.shape_cast %27 : vector<1x128x4xf32> to vector<128x4xf32>
      %29 = vector.shape_cast %23 : vector<128x4xf32> to vector<1x128x4xf32>
      tpu.vector_store %arg9[%25, %26, %c0_10], %29 {strides = array<i32>} : memref<4x128x4xf32, #tpu.memory_space<vmem>>, vector<1x128x4xf32>,
    } else {
    }
    %c2_i32 = arith.constant 2 : i32
    %9 = arith.cmpi eq, %arg0, %c2_i32 : i32
    %10 = arith.extui %9 : i1 to i32
    %c0_i32_4 = arith.constant 0 : i32
    %11 = arith.cmpi ne, %10, %c0_i32_4 : i32
    scf.if %11 {
      %cst = arith.constant 0.000000e+00 : f32
      %12 = vector.broadcast %cst : f32 to vector<128x256xf32>
      %c0_5 = arith.constant 0 : index
      %13 = arith.index_cast %1 : i32 to index
      %c0_6 = arith.constant 0 : index
      %14 = vector.load %arg9[%c0_5, %13, %c0_6] : memref<4x128x4xf32, #tpu.memory_space<vmem>>, vector<1x128x4xf32>
      %15 = vector.shape_cast %14 : vector<1x128x4xf32> to vector<128x4xf32>
      %c0_7 = arith.constant 0 : index
      %c0_8 = arith.constant 0 : index
      %c0_9 = arith.constant 0 : index
      %16 = vector.load %arg4[%c0_7, %c0_8, %c0_9] : memref<4x4x256xf32, #tpu.memory_space<vmem>>, vector<1x4x256xf32>
      %17 = vector.shape_cast %16 : vector<1x4x256xf32> to vector<4x256xf32>
      %cst_10 = arith.constant dense<0.000000e+00> : vector<128x256xf32>
      %18 = tpu.matmul %15, %17, %cst_10 {dimension_numbers = #tpu.dot_dimension_numbers<[1], [0], [0], [1], [0, 0, 1, 1], [], []>} : vector<128x4xf32>, vector<4x256xf32>, vector<128x256xf32> -> vector<128x256xf32>
      %19 = arith.addf %12, %18 : vector<128x256xf32>
      %c1 = arith.constant 1 : index
      %20 = arith.index_cast %1 : i32 to index
      %c0_11 = arith.constant 0 : index
      %21 = vector.load %arg9[%c1, %20, %c0_11] : memref<4x128x4xf32, #tpu.memory_space<vmem>>, vector<1x128x4xf32>
      %22 = vector.shape_cast %21 : vector<1x128x4xf32> to vector<128x4xf32>
      %c1_12 = arith.constant 1 : index
      %c0_13 = arith.constant 0 : index
      %c0_14 = arith.constant 0 : index
      %23 = vector.load %arg4[%c1_12, %c0_13, %c0_14] : memref<4x4x256xf32, #tpu.memory_space<vmem>>, vector<1x4x256xf32>
      %24 = vector.shape_cast %23 : vector<1x4x256xf32> to vector<4x256xf32>
      %cst_15 = arith.constant dense<0.000000e+00> : vector<128x256xf32>
      %25 = tpu.matmul %22, %24, %cst_15 {dimension_numbers = #tpu.dot_dimension_numbers<[1], [0], [0], [1], [0, 0, 1, 1], [], []>} : vector<128x4xf32>, vector<4x256xf32>, vector<128x256xf32> -> vector<128x256xf32>
      %26 = arith.addf %19, %25 : vector<128x256xf32>
      %c2 = arith.constant 2 : index
      %27 = arith.index_cast %1 : i32 to index
      %c0_16 = arith.constant 0 : index
      %28 = vector.load %arg9[%c2, %27, %c0_16] : memref<4x128x4xf32, #tpu.memory_space<vmem>>, vector<1x128x4xf32>
      %29 = vector.shape_cast %28 : vector<1x128x4xf32> to vector<128x4xf32>
      %c2_17 = arith.constant 2 : index
      %c0_18 = arith.constant 0 : index
      %c0_19 = arith.constant 0 : index
      %30 = vector.load %arg4[%c2_17, %c0_18, %c0_19] : memref<4x4x256xf32, #tpu.memory_space<vmem>>, vector<1x4x256xf32>
      %31 = vector.shape_cast %30 : vector<1x4x256xf32> to vector<4x256xf32>
      %cst_20 = arith.constant dense<0.000000e+00> : vector<128x256xf32>
      %32 = tpu.matmul %29, %31, %cst_20 {dimension_numbers = #tpu.dot_dimension_numbers<[1], [0], [0], [1], [0, 0, 1, 1], [], []>} : vector<128x4xf32>, vector<4x256xf32>, vector<128x256xf32> -> vector<128x256xf32>
      %33 = arith.addf %26, %32 : vector<128x256xf32>
      %c3 = arith.constant 3 : index
      %34 = arith.index_cast %1 : i32 to index
      %c0_21 = arith.constant 0 : index
      %35 = vector.load %arg9[%c3, %34, %c0_21] : memref<4x128x4xf32, #tpu.memory_space<vmem>>, vector<1x128x4xf32>
      %36 = vector.shape_cast %35 : vector<1x128x4xf32> to vector<128x4xf32>
      %c3_22 = arith.constant 3 : index
      %c0_23 = arith.constant 0 : index
      %c0_24 = arith.constant 0 : index
      %37 = vector.load %arg4[%c3_22, %c0_23, %c0_24] : memref<4x4x256xf32, #tpu.memory_space<vmem>>, vector<1x4x256xf32>
      %38 = vector.shape_cast %37 : vector<1x4x256xf32> to vector<4x256xf32>
      %cst_25 = arith.constant dense<0.000000e+00> : vector<128x256xf32>
      %39 = tpu.matmul %36, %38, %cst_25 {dimension_numbers = #tpu.dot_dimension_numbers<[1], [0], [0], [1], [0, 0, 1, 1], [], []>} : vector<128x4xf32>, vector<4x256xf32>, vector<128x256xf32> -> vector<128x256xf32>
      %40 = arith.addf %33, %39 : vector<128x256xf32>
      %c0_26 = arith.constant 0 : index
      %c0_27 = arith.constant 0 : index
      %41 = vector.load %arg5[%c0_26, %c0_27] : memref<1x256xf32, #tpu.memory_space<vmem>>, vector<1x256xf32>
      %42 = vector.broadcast %41 : vector<1x256xf32> to vector<128x256xf32>
      %43 = arith.addf %40, %42 : vector<128x256xf32>
      %44 = vector.extract_strided_slice %43 {offsets = [0, 0], sizes = [128, 128], strides = [1, 1]} : vector<128x256xf32> to vector<128x128xf32>
      %45 = arith.negf %44 : vector<128x128xf32>
      %46 = math.exp %45 : vector<128x128xf32>
      %cst_28 = arith.constant 1.000000e+00 : f32
      %47 = vector.broadcast %cst_28 : f32 to vector<128x128xf32>
      %48 = arith.addf %47, %46 : vector<128x128xf32>
      %49 = arith.divf %47, %48 : vector<128x128xf32>
      %50 = vector.extract_strided_slice %43 {offsets = [0, 128], sizes = [128, 128], strides = [1, 1]} : vector<128x256xf32> to vector<128x128xf32>
      %51 = math.tanh %50 : vector<128x128xf32>
      %cst_29 = arith.constant 1.000000e+00 : f32
      %52 = vector.broadcast %cst_29 : f32 to vector<128x128xf32>
      %53 = arith.subf %52, %49 : vector<128x128xf32>
      %54 = arith.mulf %53, %51 : vector<128x128xf32>
      %cst_30 = arith.constant 0.000000e+00 : f32
      %55 = vector.broadcast %cst_30 : f32 to vector<128x128xf32>
      %56 = arith.maximumf %54, %55 : vector<128x128xf32>
      %57 = tpu.transpose %56, [1, 0] : vector<128x128xf32> -> vector<128x128xf32>
      %c0_31 = arith.constant 0 : index
      %c0_32 = arith.constant 0 : index
      %58 = vector.load %arg6[%c0_31, %c0_32] : memref<128x1xf32, #tpu.memory_space<vmem>>, vector<128x1xf32>
      %59 = vector.broadcast %58 : vector<128x1xf32> to vector<128x128xf32>
      %60 = arith.mulf %57, %59 : vector<128x128xf32>
      %cst_33 = arith.constant dense<0.000000e+00> : vector<128xf32>
      %61 = vector.multi_reduction <add>, %60, %cst_33 [0] : vector<128x128xf32> to vector<128xf32>
      %62 = vector.shape_cast %61 : vector<128xf32> to vector<1x128xf32>
      %c0_34 = arith.constant 0 : index
      %c0_35 = arith.constant 0 : index
      %63 = vector.load %arg7[%c0_34, %c0_35] : memref<1x1xf32, #tpu.memory_space<vmem>>, vector<1x1xf32>
      %64 = vector.broadcast %63 : vector<1x1xf32> to vector<1x128xf32>
      %65 = arith.addf %62, %64 : vector<1x128xf32>
      %c0_36 = arith.constant 0 : index
      %c0_37 = arith.constant 0 : index
      %66 = vector.load %arg8[%c0_36, %c0_37] : memref<1x128xf32, #tpu.memory_space<vmem>>, vector<1x128xf32>
      tpu.vector_store %arg8[%c0_36, %c0_37], %65 {strides = array<i32>} : memref<1x128xf32, #tpu.memory_space<vmem>>, vector<1x128xf32>,
    } else {
    }
    return
  }
  func.func @transform_0(%arg0: i32, %arg1: i32) -> (i32, i32) {
    %c0_i32 = arith.constant 0 : i32
    %c0_i32_0 = arith.constant 0 : i32
    return %arg1, %c0_i32 : i32, i32
  }
  func.func @transform_1(%arg0: i32, %arg1: i32) -> (i32, i32) {
    %c0_i32 = arith.constant 0 : i32
    %c0_i32_0 = arith.constant 0 : i32
    %c0_i32_1 = arith.constant 0 : i32
    return %c0_i32, %c0_i32_0 : i32, i32
  }
  func.func @transform_2(%arg0: i32, %arg1: i32) -> (i32, i32, i32) {
    %c0_i32 = arith.constant 0 : i32
    %c0_i32_0 = arith.constant 0 : i32
    %c0_i32_1 = arith.constant 0 : i32
    %c0_i32_2 = arith.constant 0 : i32
    return %c0_i32, %c0_i32_0, %c0_i32_1 : i32, i32, i32
  }
  func.func @transform_3(%arg0: i32, %arg1: i32) -> (i32, i32) {
    %c0_i32 = arith.constant 0 : i32
    %c0_i32_0 = arith.constant 0 : i32
    %c0_i32_1 = arith.constant 0 : i32
    return %c0_i32, %c0_i32_0 : i32, i32
  }
  func.func @transform_4(%arg0: i32, %arg1: i32) -> (i32, i32) {
    %c0_i32 = arith.constant 0 : i32
    %c0_i32_0 = arith.constant 0 : i32
    %c0_i32_1 = arith.constant 0 : i32
    return %c0_i32, %c0_i32_0 : i32, i32
  }
  func.func @transform_5(%arg0: i32, %arg1: i32) -> (i32, i32) {
    %c0_i32 = arith.constant 0 : i32
    %c0_i32_0 = arith.constant 0 : i32
    %c0_i32_1 = arith.constant 0 : i32
    return %c0_i32, %c0_i32_0 : i32, i32
  }
  func.func @transform_6(%arg0: i32, %arg1: i32) -> (i32, i32) {
    %c0_i32 = arith.constant 0 : i32
    %c0_i32_0 = arith.constant 0 : i32
    return %c0_i32, %arg1 : i32, i32
  }
}

</mosaic_0001>

<llo_original>
// kernel: tpu_custom_call.1
$region0: #{tpu_custom_call.1}
  #allocation0 [shape = 'u32[]', space=smem, size = 0x4, offset = 0x4, fixed_abs, tag = 'smem constant byte address 0x4 - core index']
  #allocation1 [shape = 'u32[144,128]{1,0:T(1,128)}', space=vmem, size = 0x12000, scoped, tag = 'internal scratch']
  #allocation2 [shape = 'f32[4,128,4]{2,1,0:T(8,128)}', space=vmem, size = 0x40000, scoped, tag = 'scratch operand']
  #allocation3 [shape = 'f32[1,1]{1,0:T(1,128)S(1)}', space=vmem, size = 0x200, scoped, tag = 'scoped memory for tpu_custom_call.1']
  %s0 = inlined_call_operand.vmem [shape: f32[128,128], index: 0, kind: input, shape index: {}]
  %s1 = inlined_call_operand.vmem [shape: f32[128,4], index: 1, kind: input, shape index: {}]
  %s2 = inlined_call_operand.vmem [shape: f32[4,4,256], index: 2, kind: input, shape index: {}]
  %s3 = inlined_call_operand.vmem [shape: f32[1,256], index: 3, kind: input, shape index: {}]
  %s4 = inlined_call_operand.vmem [shape: f32[128,1], index: 4, kind: input, shape index: {}]
  %s5 = inlined_call_operand.<no memory space> [shape: f32[1,1], index: 5, kind: input, shape index: {}]
  %s6 = inlined_call_operand.hbm [shape: f32[1,128], index: 6, kind: output, shape index: {}]
  %s7 = sld [smem:[#allocation0]]
  $region69: #{tpu_custom_call.1} parent=0
    _
  %s9 = ssub.s32 1, %s7
  %s10 = scalar_select 0, %s9, %s7
  %v11 = vstv %s5
  %12 = vst [vmem:[#allocation3] sm:$0x1] %v11
  $region1: #{tpu_custom_call.1} parent=0
    #allocation4 [shape = 'u8[512]{0}', space=vmem, size = 0x400, scoped, tag = 'output window, operand 0, single buffered']
    #allocation5 [shape = 's32[2]{0}', space=sflag, size = 0x8, scoped, tag = 'scoped memory for tpu_custom_call.1']
    %13 = vsyncpa [#allocation5], 0
    loop: start=0, step=1, limit=5
    $region2: #{tpu_custom_call.1} parent=1 // loop_pre_header
      _
    $region3: #{tpu_custom_call.1} parent=1 // loop_header
      %s15 = sphi 0, %s19
      %p16 = scmp.ge.s32.totalorder %s15, 5
      %s22 = sphi 0, %s34
      %s23 = sphi 0, %s30
      %s24 = sphi 0, %s22
      %s25 = sphi 0, %s23
      %s26 = sphi 0, %s24
      %s27 = sphi 0, %s25
      %s37 = sphi 0, %s39
      %s40 = sphi 0, %s37
      %s41 = sphi 0, %s40
      %s57 = sphi 0, %s41
      %s61 = sphi 0, %s61
      %s63 = sphi 0, %s61
      %s64 = sphi 0, %s63
      %s78 = sphi 0, %s64
      %s82 = sphi 0, %s82
      %s84 = sphi 0, %s82
      %s85 = sphi 0, %s84
      %s99 = sphi 0, %s85
      %s103 = sphi 0, %s103
      %s105 = sphi 0, %s103
      %s106 = sphi 0, %s105
      %s120 = sphi 0, %s106
      %s124 = sphi 0, %s124
      %s126 = sphi 0, %s124
      %s127 = sphi 0, %s126
      %s141 = sphi 0, %s127
      %s145 = sphi 0, %s145
      %s147 = sphi 0, %s145
      %s148 = sphi 0, %s147
      %s162 = sphi 0, %s148
      %s168 = sphi 0, %s170
      %s171 = sphi 0, %s168
      %s172 = sphi 0, %s171
      %s188 = sphi 0, %s172
    $region4: #{tpu_custom_call.1} parent=1 // loop_header_branch
      %18 = sbr.rel (%p16) target = $region8
    $region5: #{tpu_custom_call.1} parent=1 // loop_body
      %s20 = ssub.s32 %s15, 1
      %s21 = ssub.s32 %s15, 2
      %s28 = sadd.s32 1, %s23
      %p29 = scmp.ge.s32.totalorder %s28, 1
      %s30 = scalar_select %p29, 0, %s28
      %s31 = sadd.s32 1, %s22
      %s32 = scalar_select %p29, %s31, %s22
      %p33 = scmp.ge.s32.totalorder %s32, 3
      %s34 = scalar_select %p33, 0, %s32
      %s35 = ssub.s32 %s23, %s30
      %p36 = scmp.eq.s32.totalorder %s35, 0
      %s38 = sadd.s32 %s37, 1
      %s39 = scalar_select %p36, %s37, %s38
      %p42 = pneg %p36
      %p43 = scmp.eq.s32.totalorder %s15, 2
      %p44 = por %p42, %p43
      %p45 = scmp.ne.s32.totalorder %s37, %s40
      %p46 = scmp.eq.s32.totalorder %s15, 0
      %p47 = por %p45, %p46
      %p48 = scmp.ne.s32.totalorder %s37, %s40
      %p49 = scmp.eq.s32.totalorder %s20, 2
      %p50 = por %p48, %p49
      %p51 = scmp.ne.s32.totalorder %s40, %s41
      %p52 = scmp.eq.s32.totalorder %s20, 0
      %p53 = por %p51, %p52
      %p54 = scmp.ne.s32.totalorder %s40, %s41
      %p55 = scmp.eq.s32.totalorder %s21, 2
      %p56 = por %p54, %p55
      %p58 = scmp.ne.s32.totalorder %s41, %s57
      %p59 = scmp.eq.s32.totalorder %s21, 0
      %p60 = por %p58, %p59
      %s62 = sadd.s32 %s61, 1
      %p65 = scmp.eq.s32.totalorder %s15, 2
      %p66 = scmp.ne.s32.totalorder %s61, %s63
      %p67 = scmp.eq.s32.totalorder %s15, 0
      %p68 = por %p66, %p67
      %p69 = scmp.ne.s32.totalorder %s61, %s63
      %p70 = scmp.eq.s32.totalorder %s20, 2
      %p71 = por %p69, %p70
      %p72 = scmp.ne.s32.totalorder %s63, %s64
      %p73 = scmp.eq.s32.totalorder %s20, 0
      %p74 = por %p72, %p73
      %p75 = scmp.ne.s32.totalorder %s63, %s64
      %p76 = scmp.eq.s32.totalorder %s21, 2
      %p77 = por %p75, %p76
      %p79 = scmp.ne.s32.totalorder %s64, %s78
      %p80 = scmp.eq.s32.totalorder %s21, 0
      %p81 = por %p79, %p80
      %s83 = sadd.s32 %s82, 1
      %p86 = scmp.eq.s32.totalorder %s15, 2
      %p87 = scmp.ne.s32.totalorder %s82, %s84
      %p88 = scmp.eq.s32.totalorder %s15, 0
      %p89 = por %p87, %p88
      %p90 = scmp.ne.s32.totalorder %s82, %s84
      %p91 = scmp.eq.s32.totalorder %s20, 2
      %p92 = por %p90, %p91
      %p93 = scmp.ne.s32.totalorder %s84, %s85
      %p94 = scmp.eq.s32.totalorder %s20, 0
      %p95 = por %p93, %p94
      %p96 = scmp.ne.s32.totalorder %s84, %s85
      %p97 = scmp.eq.s32.totalorder %s21, 2
      %p98 = por %p96, %p97
      %p100 = scmp.ne.s32.totalorder %s85, %s99
      %p101 = scmp.eq.s32.totalorder %s21, 0
      %p102 = por %p100, %p101
      %s104 = sadd.s32 %s103, 1
      %p107 = scmp.eq.s32.totalorder %s15, 2
      %p108 = scmp.ne.s32.totalorder %s103, %s105
      %p109 = scmp.eq.s32.totalorder %s15, 0
      %p110 = por %p108, %p109
      %p111 = scmp.ne.s32.totalorder %s103, %s105
      %p112 = scmp.eq.s32.totalorder %s20, 2
      %p113 = por %p111, %p112
      %p114 = scmp.ne.s32.totalorder %s105, %s106
      %p115 = scmp.eq.s32.totalorder %s20, 0
      %p116 = por %p114, %p115
      %p117 = scmp.ne.s32.totalorder %s105, %s106
      %p118 = scmp.eq.s32.totalorder %s21, 2
      %p119 = por %p117, %p118
      %p121 = scmp.ne.s32.totalorder %s106, %s120
      %p122 = scmp.eq.s32.totalorder %s21, 0
      %p123 = por %p121, %p122
      %s125 = sadd.s32 %s124, 1
      %p128 = scmp.eq.s32.totalorder %s15, 2
      %p129 = scmp.ne.s32.totalorder %s124, %s126
      %p130 = scmp.eq.s32.totalorder %s15, 0
      %p131 = por %p129, %p130
      %p132 = scmp.ne.s32.totalorder %s124, %s126
      %p133 = scmp.eq.s32.totalorder %s20, 2
      %p134 = por %p132, %p133
      %p135 = scmp.ne.s32.totalorder %s126, %s127
      %p136 = scmp.eq.s32.totalorder %s20, 0
      %p137 = por %p135, %p136
      %p138 = scmp.ne.s32.totalorder %s126, %s127
      %p139 = scmp.eq.s32.totalorder %s21, 2
      %p140 = por %p138, %p139
      %p142 = scmp.ne.s32.totalorder %s127, %s141
      %p143 = scmp.eq.s32.totalorder %s21, 0
      %p144 = por %p142, %p143
      %s146 = sadd.s32 %s145, 1
      %p149 = scmp.eq.s32.totalorder %s15, 2
      %p150 = scmp.ne.s32.totalorder %s145, %s147
      %p151 = scmp.eq.s32.totalorder %s15, 0
      %p152 = por %p150, %p151
      %p153 = scmp.ne.s32.totalorder %s145, %s147
      %p154 = scmp.eq.s32.totalorder %s20, 2
      %p155 = por %p153, %p154
      %p156 = scmp.ne.s32.totalorder %s147, %s148
      %p157 = scmp.eq.s32.totalorder %s20, 0
      %p158 = por %p156, %p157
      %p159 = scmp.ne.s32.totalorder %s147, %s148
      %p160 = scmp.eq.s32.totalorder %s21, 2
      %p161 = por %p159, %p160
      %p163 = scmp.ne.s32.totalorder %s148, %s162
      %p164 = scmp.eq.s32.totalorder %s21, 0
      %p165 = por %p163, %p164
      %s166 = ssub.s32 %s23, %s30
      %p167 = scmp.eq.s32.totalorder %s166, 0
      %s169 = sadd.s32 %s168, 1
      %s170 = scalar_select %p167, %s168, %s169
      %p173 = pneg %p167
      %p174 = scmp.eq.s32.totalorder %s15, 2
      %p175 = por %p173, %p174
      %p176 = scmp.ne.s32.totalorder %s168, %s171
      %p177 = scmp.eq.s32.totalorder %s15, 0
      %p178 = por %p176, %p177
      %p179 = scmp.ne.s32.totalorder %s168, %s171
      %p180 = scmp.eq.s32.totalorder %s20, 2
      %p181 = por %p179, %p180
      %p182 = scmp.ne.s32.totalorder %s171, %s172
      %p183 = scmp.eq.s32.totalorder %s20, 0
      %p184 = por %p182, %p183
      %p185 = scmp.ne.s32.totalorder %s171, %s172
      %p186 = scmp.eq.s32.totalorder %s21, 2
      %p187 = por %p185, %p186
      %p189 = scmp.ne.s32.totalorder %s172, %s188
      %p190 = scmp.eq.s32.totalorder %s21, 0
      %p191 = por %p189, %p190
      %p192 = scmp.le.s32.totalorder 1, %s15
      %p193 = scmp.lt.s32.totalorder %s15, 4
      %p194 = pnand %p192, %p193
      %p195 = pneg %p194
      // Predicated region
      $region9: #{tpu_custom_call.1} parent=5 // pred_check
        _
      $region10: #{tpu_custom_call.1} parent=5 // pred_check_branch
        %197 = sbr.rel (%p194) target = $region12
      $region11: #{tpu_custom_call.1} parent=5 // pred_region
        %s198 = ssub.s32 %s15, 1
        // Predicated region
        $region13: #{tpu_custom_call.1} parent=11 // pred_check
          %p199 = pneg %p53
        $region14: #{tpu_custom_call.1} parent=11 // pred_check_branch
          %201 = sbr.rel (%p199) target = $region16
        $region15: #{tpu_custom_call.1} parent=11 // pred_region
          %s202 = smul.u32 16, %s25
          %p203 = scmp.lt.s32.totalorder %s202, 15
          %s204 = scalar_select %p203, %s202, 15
          %s205 = smul.addr %s204, 8
          %s206 = scalar_lea.vmem %s0, %s205
          %s207 = smul.u32 16, %s25
        $region16: #{tpu_custom_call.1} parent=11 // pred_fallthru
          _
        // Predicated region
        $region17: #{tpu_custom_call.1} parent=11 // pred_check
          %p208 = pneg %p74
        $region18: #{tpu_custom_call.1} parent=11 // pred_check_branch
          %210 = sbr.rel (%p208) target = $region20
        $region19: #{tpu_custom_call.1} parent=11 // pred_region
          _
        $region20: #{tpu_custom_call.1} parent=11 // pred_fallthru
          _
        // Predicated region
        $region21: #{tpu_custom_call.1} parent=11 // pred_check
          %p211 = pneg %p95
        $region22: #{tpu_custom_call.1} parent=11 // pred_check_branch
          %213 = sbr.rel (%p211) target = $region24
        $region23: #{tpu_custom_call.1} parent=11 // pred_region
          _
        $region24: #{tpu_custom_call.1} parent=11 // pred_fallthru
          _
        // Predicated region
        $region25: #{tpu_custom_call.1} parent=11 // pred_check
          %p214 = pneg %p116
        $region26: #{tpu_custom_call.1} parent=11 // pred_check_branch
          %216 = sbr.rel (%p214) target = $region28
        $region27: #{tpu_custom_call.1} parent=11 // pred_region
          _
        $region28: #{tpu_custom_call.1} parent=11 // pred_fallthru
          _
        // Predicated region
        $region29: #{tpu_custom_call.1} parent=11 // pred_check
          %p217 = pneg %p137
        $region30: #{tpu_custom_call.1} parent=11 // pred_check_branch
          %219 = sbr.rel (%p217) target = $region32
        $region31: #{tpu_custom_call.1} parent=11 // pred_region
          _
        $region32: #{tpu_custom_call.1} parent=11 // pred_fallthru
          _
        // Predicated region
        $region33: #{tpu_custom_call.1} parent=11 // pred_check
          %p220 = pneg %p158
        $region34: #{tpu_custom_call.1} parent=11 // pred_check_branch
          %222 = sbr.rel (%p220) target = $region36
        $region35: #{tpu_custom_call.1} parent=11 // pred_region
          _
        $region36: #{tpu_custom_call.1} parent=11 // pred_fallthru
          _
      $region12: #{tpu_custom_call.1} parent=5 // pred_fallthru
        _
      %p223 = scmp.lt.s32.totalorder %s15, 3
      // Predicated region
      $region37: #{tpu_custom_call.1} parent=5 // pred_check
        %p224 = pneg %p223
      $region38: #{tpu_custom_call.1} parent=5 // pred_check_branch
        %226 = sbr.rel (%p224) target = $region40
      $region39: #{tpu_custom_call.1} parent=5 // pred_region
        _
      $region40: #{tpu_custom_call.1} parent=5 // pred_fallthru
        _
      %p227 = scmp.le.s32.totalorder 1, %s15
      %p228 = scmp.lt.s32.totalorder %s15, 4
      %p229 = pnand %p227, %p228
      %p230 = pneg %p229
      // Predicated region
      $region41: #{tpu_custom_call.1} parent=5 // pred_check
        _
      $region42: #{tpu_custom_call.1} parent=5 // pred_check_branch
        %232 = sbr.rel (%p229) target = $region44
      $region43: #{tpu_custom_call.1} parent=5 // pred_region
        %s233 = ssub.s32 %s15, 1
        %s234 = smul.u32 16, %s25
        %p235 = scmp.lt.s32.totalorder %s234, 15
        %s236 = scalar_select %p235, %s234, 15
        %s237 = smul.addr %s236, 8
        %s238 = scalar_lea.vmem %s0, %s237
        %p239 = pneg %p53
        %p240 = pneg %p50
        %p241 = pneg %p74
        %p242 = pneg %p71
        %p243 = pneg %p95
        %p244 = pneg %p92
        %p245 = pneg %p116
        %p246 = pneg %p113
        %p247 = pneg %p137
        %p248 = pneg %p134
        %p249 = pneg %p158
        %p250 = pneg %p155
        %p251 = pneg %p184
        %p252 = pneg %p181
        %s253 = smul.u32 16, %s25
        %p254 = scmp.lt.s32.totalorder %s253, 15
        %s255 = scalar_select %p254, %s253, 15
        %s256 = smul.addr %s255, 8
        %s257 = scalar_lea.vmem %s0, %s256
        %s258 = smul.u32 16, %s25
        %s259 = smul.u32 %s25, 128
        %v260 = vld [vmem:[%s257] sm:$0xff]
        %v261 = vld [vmem:[%s257 + $0x8] sm:$0xff]
        %v262 = vld [vmem:[%s257 + $0x10] sm:$0xff]
        %v263 = vld [vmem:[%s257 + $0x18] sm:$0xff]
        %v264 = vld [vmem:[%s257 + $0x20] sm:$0xff]
        %v265 = vld [vmem:[%s257 + $0x28] sm:$0xff]
        %v266 = vld [vmem:[%s257 + $0x30] sm:$0xff]
        %v267 = vld [vmem:[%s257 + $0x38] sm:$0xff]
        %v268 = vld [vmem:[%s257 + $0x40] sm:$0xff]
        %v269 = vld [vmem:[%s257 + $0x48] sm:$0xff]
        %v270 = vld [vmem:[%s257 + $0x50] sm:$0xff]
        %v271 = vld [vmem:[%s257 + $0x58] sm:$0xff]
        %v272 = vld [vmem:[%s257 + $0x60] sm:$0xff]
        %v273 = vld [vmem:[%s257 + $0x68] sm:$0xff]
        %v274 = vld [vmem:[%s257 + $0x70] sm:$0xff]
        %v275 = vld [vmem:[%s257 + $0x78] sm:$0xff]
        %p276 = scmp.eq.s32.totalorder %s24, 0
        // Predicated region
        $region45: #{tpu_custom_call.1} parent=43 // pred_check
          %p277 = pneg %p276
        $region46: #{tpu_custom_call.1} parent=43 // pred_check_branch
          %279 = sbr.rel (%p277) target = $region48
        $region47: #{tpu_custom_call.1} parent=43 // pred_region
          %s280 = scalar_lea.vmem %s1, %s259
          %v281 = vld [vmem:[%s280] sm:$0xff]
          %v282 = vld [vmem:[%s280 + $0x8] sm:$0xff]
          %v283 = vld [vmem:[%s280 + $0x10] sm:$0xff]
          %v284 = vld [vmem:[%s280 + $0x18] sm:$0xff]
          %v285 = vld [vmem:[%s280 + $0x20] sm:$0xff]
          %v286 = vld [vmem:[%s280 + $0x28] sm:$0xff]
          %v287 = vld [vmem:[%s280 + $0x30] sm:$0xff]
          %v288 = vld [vmem:[%s280 + $0x38] sm:$0xff]
          %v289 = vld [vmem:[%s280 + $0x40] sm:$0xff]
          %v290 = vld [vmem:[%s280 + $0x48] sm:$0xff]
          %v291 = vld [vmem:[%s280 + $0x50] sm:$0xff]
          %v292 = vld [vmem:[%s280 + $0x58] sm:$0xff]
          %v293 = vld [vmem:[%s280 + $0x60] sm:$0xff]
          %v294 = vld [vmem:[%s280 + $0x68] sm:$0xff]
          %v295 = vld [vmem:[%s280 + $0x70] sm:$0xff]
          %v296 = vld [vmem:[%s280 + $0x78] sm:$0xff]
          %s297 = scalar_lea.vmem [#allocation2], %s259
          %vm298 = vcmask 31744
          %299 = vst.msk [vmem:[%s297] sm:$0xff] %vm298, %v281
          %300 = vst.msk [vmem:[%s297 + $0x8] sm:$0xff] %vm298, %v282
          %301 = vst.msk [vmem:[%s297 + $0x10] sm:$0xff] %vm298, %v283
          %302 = vst.msk [vmem:[%s297 + $0x18] sm:$0xff] %vm298, %v284
          %303 = vst.msk [vmem:[%s297 + $0x20] sm:$0xff] %vm298, %v285
          %304 = vst.msk [vmem:[%s297 + $0x28] sm:$0xff] %vm298, %v286
          %305 = vst.msk [vmem:[%s297 + $0x30] sm:$0xff] %vm298, %v287
          %306 = vst.msk [vmem:[%s297 + $0x38] sm:$0xff] %vm298, %v288
          %307 = vst.msk [vmem:[%s297 + $0x40] sm:$0xff] %vm298, %v289
          %308 = vst.msk [vmem:[%s297 + $0x48] sm:$0xff] %vm298, %v290
          %309 = vst.msk [vmem:[%s297 + $0x50] sm:$0xff] %vm298, %v291
          %310 = vst.msk [vmem:[%s297 + $0x58] sm:$0xff] %vm298, %v292
          %311 = vst.msk [vmem:[%s297 + $0x60] sm:$0xff] %vm298, %v293
          %312 = vst.msk [vmem:[%s297 + $0x68] sm:$0xff] %vm298, %v294
          %313 = vst.msk [vmem:[%s297 + $0x70] sm:$0xff] %vm298, %v295
          %314 = vst.msk [vmem:[%s297 + $0x78] sm:$0xff] %vm298, %v296
          %v315 = vld [vmem:[%s1] sm:$0xff]
          %v316 = vld [vmem:[%s1 + $0x8] sm:$0xff]
          %v317 = vld [vmem:[%s1 + $0x10] sm:$0xff]
          %v318 = vld [vmem:[%s1 + $0x18] sm:$0xff]
          %v319 = vld [vmem:[%s1 + $0x20] sm:$0xff]
          %v320 = vld [vmem:[%s1 + $0x28] sm:$0xff]
          %v321 = vld [vmem:[%s1 + $0x30] sm:$0xff]
          %v322 = vld [vmem:[%s1 + $0x38] sm:$0xff]
          %v323 = vld [vmem:[%s1 + $0x40] sm:$0xff]
          %v324 = vld [vmem:[%s1 + $0x48] sm:$0xff]
          %v325 = vld [vmem:[%s1 + $0x50] sm:$0xff]
          %v326 = vld [vmem:[%s1 + $0x58] sm:$0xff]
          %v327 = vld [vmem:[%s1 + $0x60] sm:$0xff]
          %v328 = vld [vmem:[%s1 + $0x68] sm:$0xff]
          %v329 = vld [vmem:[%s1 + $0x70] sm:$0xff]
          %v330 = vld [vmem:[%s1 + $0x78] sm:$0xff]
          %331 = vmatprep.subr.mxu0 0.0
          %332 = vmatpush1.msra.mxu0 %v315
          %333 = vmatprep.subr.mxu0 0.0
          %334 = vmatpush1.msra.mxu0 %v316
          %335 = vmatprep.subr.mxu0 0.0
          %336 = vmatpush1.msra.mxu0 %v317
          %337 = vmatprep.subr.mxu0 0.0
          %338 = vmatpush1.msra.mxu0 %v318
          %339 = vmatprep.subr.mxu0 0.0
          %340 = vmatpush1.msra.mxu0 %v319
          %341 = vmatprep.subr.mxu0 0.0
          %342 = vmatpush1.msra.mxu0 %v320
          %343 = vmatprep.subr.mxu0 0.0
          %344 = vmatpush1.msra.mxu0 %v321
          %345 = vmatprep.subr.mxu0 0.0
          %346 = vmatpush1.msra.mxu0 %v322
          %347 = vmatprep.subr.mxu0 0.0
          %348 = vmatpush1.msra.mxu0 %v323
          %349 = vmatprep.subr.mxu0 0.0
          %350 = vmatpush1.msra.mxu0 %v324
          %351 = vmatprep.subr.mxu0 0.0
          %352 = vmatpush1.msra.mxu0 %v325
          %353 = vmatprep.subr.mxu0 0.0
          %354 = vmatpush1.msra.mxu0 %v326
          %355 = vmatprep.subr.mxu0 0.0
          %356 = vmatpush1.msra.mxu0 %v327
          %357 = vmatprep.subr.mxu0 0.0
          %358 = vmatpush1.msra.mxu0 %v328
          %359 = vmatprep.subr.mxu0 0.0
          %360 = vmatpush1.msra.mxu0 %v329
          %361 = vmatprep.subr.mxu0 0.0
          %362 = vmatpush1.msra.mxu0 %v330
          %363 = vmatprep.subr.mxu0 0.0
          %364 = vmatpush1.msra.mxu0 0.0
          %365 = vmatprep.subr.mxu0 0.0
          %366 = vmatpush1.msra.mxu0 0.0
          %367 = vmatprep.subr.mxu0 0.0
          %368 = vmatpush1.msra.mxu0 0.0
          %369 = vmatprep.subr.mxu0 0.0
          %370 = vmatpush1.msra.mxu0 0.0
          %371 = vmatprep.subr.mxu0 0.0
          %372 = vmatpush1.msra.mxu0 0.0
          %373 = vmatprep.subr.mxu0 0.0
          %374 = vmatpush1.msra.mxu0 0.0
          %375 = vmatprep.subr.mxu0 0.0
          %376 = vmatpush1.msra.mxu0 0.0
          %377 = vmatprep.subr.mxu0 0.0
          %378 = vmatpush1.msra.mxu0 0.0
          %379 = vmatprep.subr.mxu0 0.0
          %380 = vmatpush1.msra.mxu0 0.0
          %381 = vmatprep.subr.mxu0 0.0
          %382 = vmatpush1.msra.mxu0 0.0
          %383 = vmatprep.subr.mxu0 0.0
          %384 = vmatpush1.msra.mxu0 0.0
          %385 = vmatprep.subr.mxu0 0.0
          %386 = vmatpush1.msra.mxu0 0.0
          %387 = vmatprep.subr.mxu0 0.0
          %388 = vmatpush1.msra.mxu0 0.0
          %389 = vmatprep.subr.mxu0 0.0
          %390 = vmatpush1.msra.mxu0 0.0
          %391 = vmatprep.subr.mxu0 0.0
          %392 = vmatpush1.msra.mxu0 0.0
          %393 = vmatprep.subr.mxu0 0.0
          %394 = vmatpush1.msra.mxu0 0.0
          %395 = vmatprep.mubr.f32.mxu0 0.0
          %396 = vmatmul.mubr.f32.gmra.mrb[0].mxu0 %v260
          %v397 = vpop.f32.mrb[0].mxu0
          %v398 = vadd.f32 0.0, %v397
          %v399 = vpop.f32.mrb[0].mxu0
          %400 = vmatprep.mubr.f32.mxu0 0.0
          %401 = vmatmul.mubr.f32.gmra.mrb[0].mxu0 %v261
          %v402 = vpop.f32.mrb[0].mxu0
          %v403 = vadd.f32 0.0, %v402
          %v404 = vpop.f32.mrb[0].mxu0
          %405 = vmatprep.mubr.f32.mxu0 0.0
          %406 = vmatmul.mubr.f32.gmra.mrb[0].mxu0 %v262
          %v407 = vpop.f32.mrb[0].mxu0
          %v408 = vadd.f32 0.0, %v407
          %v409 = vpop.f32.mrb[0].mxu0
          %410 = vmatprep.mubr.f32.mxu0 0.0
          %411 = vmatmul.mubr.f32.gmra.mrb[0].mxu0 %v263
          %v412 = vpop.f32.mrb[0].mxu0
          %v413 = vadd.f32 0.0, %v412
          %v414 = vpop.f32.mrb[0].mxu0
          %415 = vmatprep.mubr.f32.mxu0 0.0
          %416 = vmatmul.mubr.f32.gmra.mrb[0].mxu0 %v264
          %v417 = vpop.f32.mrb[0].mxu0
          %v418 = vadd.f32 0.0, %v417
          %v419 = vpop.f32.mrb[0].mxu0
          %420 = vmatprep.mubr.f32.mxu0 0.0
          %421 = vmatmul.mubr.f32.gmra.mrb[0].mxu0 %v265
          %v422 = vpop.f32.mrb[0].mxu0
          %v423 = vadd.f32 0.0, %v422
          %v424 = vpop.f32.mrb[0].mxu0
          %425 = vmatprep.mubr.f32.mxu0 0.0
          %426 = vmatmul.mubr.f32.gmra.mrb[0].mxu0 %v266
          %v427 = vpop.f32.mrb[0].mxu0
          %v428 = vadd.f32 0.0, %v427
          %v429 = vpop.f32.mrb[0].mxu0
          %430 = vmatprep.mubr.f32.mxu0 0.0
          %431 = vmatmul.mubr.f32.gmra.mrb[0].mxu0 %v267
          %v432 = vpop.f32.mrb[0].mxu0
          %v433 = vadd.f32 0.0, %v432
          %v434 = vpop.f32.mrb[0].mxu0
          %435 = vmatprep.mubr.f32.mxu0 0.0
          %436 = vmatmul.mubr.f32.gmra.mrb[0].mxu0 %v268
          %v437 = vpop.f32.mrb[0].mxu0
          %v438 = vadd.f32 0.0, %v437
          %v439 = vpop.f32.mrb[0].mxu0
          %440 = vmatprep.mubr.f32.mxu0 0.0
          %441 = vmatmul.mubr.f32.gmra.mrb[0].mxu0 %v269
          %v442 = vpop.f32.mrb[0].mxu0
          %v443 = vadd.f32 0.0, %v442
          %v444 = vpop.f32.mrb[0].mxu0
          %445 = vmatprep.mubr.f32.mxu0 0.0
          %446 = vmatmul.mubr.f32.gmra.mrb[0].mxu0 %v270
          %v447 = vpop.f32.mrb[0].mxu0
          %v448 = vadd.f32 0.0, %v447
          %v449 = vpop.f32.mrb[0].mxu0
          %450 = vmatprep.mubr.f32.mxu0 0.0
          %451 = vmatmul.mubr.f32.gmra.mrb[0].mxu0 %v271
          %v452 = vpop.f32.mrb[0].mxu0
          %v453 = vadd.f32 0.0, %v452
          %v454 = vpop.f32.mrb[0].mxu0
          %455 = vmatprep.mubr.f32.mxu0 0.0
          %456 = vmatmul.mubr.f32.gmra.mrb[0].mxu0 %v272
          %v457 = vpop.f32.mrb[0].mxu0
          %v458 = vadd.f32 0.0, %v457
          %v459 = vpop.f32.mrb[0].mxu0
          %460 = vmatprep.mubr.f32.mxu0 0.0
          %461 = vmatmul.mubr.f32.gmra.mrb[0].mxu0 %v273
          %v462 = vpop.f32.mrb[0].mxu0
          %v463 = vadd.f32 0.0, %v462
          %v464 = vpop.f32.mrb[0].mxu0
          %465 = vmatprep.mubr.f32.mxu0 0.0
          %466 = vmatmul.mubr.f32.gmra.mrb[0].mxu0 %v274
          %v467 = vpop.f32.mrb[0].mxu0
          %v468 = vadd.f32 0.0, %v467
          %v469 = vpop.f32.mrb[0].mxu0
          %470 = vmatprep.mubr.f32.mxu0 0.0
          %471 = vmatmul.mubr.f32.gmra.mrb[0].mxu0 %v275
          %v472 = vpop.f32.mrb[0].mxu0
          %v473 = vadd.f32 0.0, %v472
          %v474 = vpop.f32.mrb[0].mxu0
          %475 = vdwg.mxu0
          %s476 = sadd.s32 %s259, 128
          %s477 = scalar_lea.vmem [#allocation2], %s476
          %478 = vst.msk [vmem:[%s477] sm:$0xff] %vm298, %v398
          %479 = vst.msk [vmem:[%s477 + $0x8] sm:$0xff] %vm298, %v403
          %480 = vst.msk [vmem:[%s477 + $0x10] sm:$0xff] %vm298, %v408
          %481 = vst.msk [vmem:[%s477 + $0x18] sm:$0xff] %vm298, %v413
          %482 = vst.msk [vmem:[%s477 + $0x20] sm:$0xff] %vm298, %v418
          %483 = vst.msk [vmem:[%s477 + $0x28] sm:$0xff] %vm298, %v423
          %484 = vst.msk [vmem:[%s477 + $0x30] sm:$0xff] %vm298, %v428
          %485 = vst.msk [vmem:[%s477 + $0x38] sm:$0xff] %vm298, %v433
          %486 = vst.msk [vmem:[%s477 + $0x40] sm:$0xff] %vm298, %v438
          %487 = vst.msk [vmem:[%s477 + $0x48] sm:$0xff] %vm298, %v443
          %488 = vst.msk [vmem:[%s477 + $0x50] sm:$0xff] %vm298, %v448
          %489 = vst.msk [vmem:[%s477 + $0x58] sm:$0xff] %vm298, %v453
          %490 = vst.msk [vmem:[%s477 + $0x60] sm:$0xff] %vm298, %v458
          %491 = vst.msk [vmem:[%s477 + $0x68] sm:$0xff] %vm298, %v463
          %492 = vst.msk [vmem:[%s477 + $0x70] sm:$0xff] %vm298, %v468
          %493 = vst.msk [vmem:[%s477 + $0x78] sm:$0xff] %vm298, %v473
        $region48: #{tpu_custom_call.1} parent=43 // pred_fallthru
          _
        %p494 = scmp.gt.s32.totalorder %s24, 0
        // Predicated region
        $region49: #{tpu_custom_call.1} parent=43 // pred_check
          %p495 = pneg %p494
        $region50: #{tpu_custom_call.1} parent=43 // pred_check_branch
          %497 = sbr.rel (%p495) target = $region52
        $region51: #{tpu_custom_call.1} parent=43 // pred_region
          %s498 = smul.u32 %s24, 128
          %s499 = scalar_lea.vmem [#allocation2], %s498
          %v500 = vld [vmem:[%s499] sm:$0xff]
          %v501 = vld [vmem:[%s499 + $0x8] sm:$0xff]
          %v502 = vld [vmem:[%s499 + $0x10] sm:$0xff]
          %v503 = vld [vmem:[%s499 + $0x18] sm:$0xff]
          %v504 = vld [vmem:[%s499 + $0x20] sm:$0xff]
          %v505 = vld [vmem:[%s499 + $0x28] sm:$0xff]
          %v506 = vld [vmem:[%s499 + $0x30] sm:$0xff]
          %v507 = vld [vmem:[%s499 + $0x38] sm:$0xff]
          %v508 = vld [vmem:[%s499 + $0x40] sm:$0xff]
          %v509 = vld [vmem:[%s499 + $0x48] sm:$0xff]
          %v510 = vld [vmem:[%s499 + $0x50] sm:$0xff]
          %v511 = vld [vmem:[%s499 + $0x58] sm:$0xff]
          %v512 = vld [vmem:[%s499 + $0x60] sm:$0xff]
          %v513 = vld [vmem:[%s499 + $0x68] sm:$0xff]
          %v514 = vld [vmem:[%s499 + $0x70] sm:$0xff]
          %v515 = vld [vmem:[%s499 + $0x78] sm:$0xff]
          %s516 = ssub.s32 %s24, 1
          %s517 = smul.u32 %s516, 128
          %s518 = sadd.s32 %s259, %s517
          %s519 = scalar_lea.vmem [#allocation2], %s518
          %v520 = vld [vmem:[%s519] sm:$0xff]
          %v521 = vld [vmem:[%s519 + $0x8] sm:$0xff]
          %v522 = vld [vmem:[%s519 + $0x10] sm:$0xff]
          %v523 = vld [vmem:[%s519 + $0x18] sm:$0xff]
          %v524 = vld [vmem:[%s519 + $0x20] sm:$0xff]
          %v525 = vld [vmem:[%s519 + $0x28] sm:$0xff]
          %v526 = vld [vmem:[%s519 + $0x30] sm:$0xff]
          %v527 = vld [vmem:[%s519 + $0x38] sm:$0xff]
          %v528 = vld [vmem:[%s519 + $0x40] sm:$0xff]
          %v529 = vld [vmem:[%s519 + $0x48] sm:$0xff]
          %v530 = vld [vmem:[%s519 + $0x50] sm:$0xff]
          %v531 = vld [vmem:[%s519 + $0x58] sm:$0xff]
          %v532 = vld [vmem:[%s519 + $0x60] sm:$0xff]
          %v533 = vld [vmem:[%s519 + $0x68] sm:$0xff]
          %v534 = vld [vmem:[%s519 + $0x70] sm:$0xff]
          %v535 = vld [vmem:[%s519 + $0x78] sm:$0xff]
          %536 = vmatprep.subr.mxu0 0.0
          %537 = vmatpush1.msra.mxu0 %v500
          %538 = vmatprep.subr.mxu0 0.0
          %539 = vmatpush1.msra.mxu0 %v501
          %540 = vmatprep.subr.mxu0 0.0
          %541 = vmatpush1.msra.mxu0 %v502
          %542 = vmatprep.subr.mxu0 0.0
          %543 = vmatpush1.msra.mxu0 %v503
          %544 = vmatprep.subr.mxu0 0.0
          %545 = vmatpush1.msra.mxu0 %v504
          %546 = vmatprep.subr.mxu0 0.0
          %547 = vmatpush1.msra.mxu0 %v505
          %548 = vmatprep.subr.mxu0 0.0
          %549 = vmatpush1.msra.mxu0 %v506
          %550 = vmatprep.subr.mxu0 0.0
          %551 = vmatpush1.msra.mxu0 %v507
          %552 = vmatprep.subr.mxu0 0.0
          %553 = vmatpush1.msra.mxu0 %v508
          %554 = vmatprep.subr.mxu0 0.0
          %555 = vmatpush1.msra.mxu0 %v509
          %556 = vmatprep.subr.mxu0 0.0
          %557 = vmatpush1.msra.mxu0 %v510
          %558 = vmatprep.subr.mxu0 0.0
          %559 = vmatpush1.msra.mxu0 %v511
          %560 = vmatprep.subr.mxu0 0.0
          %561 = vmatpush1.msra.mxu0 %v512
          %562 = vmatprep.subr.mxu0 0.0
          %563 = vmatpush1.msra.mxu0 %v513
          %564 = vmatprep.subr.mxu0 0.0
          %565 = vmatpush1.msra.mxu0 %v514
          %566 = vmatprep.subr.mxu0 0.0
          %567 = vmatpush1.msra.mxu0 %v515
          %568 = vmatprep.subr.mxu0 0.0
          %569 = vmatpush1.msra.mxu0 0.0
          %570 = vmatprep.subr.mxu0 0.0
          %571 = vmatpush1.msra.mxu0 0.0
          %572 = vmatprep.subr.mxu0 0.0
          %573 = vmatpush1.msra.mxu0 0.0
          %574 = vmatprep.subr.mxu0 0.0
          %575 = vmatpush1.msra.mxu0 0.0
          %576 = vmatprep.subr.mxu0 0.0
          %577 = vmatpush1.msra.mxu0 0.0
          %578 = vmatprep.subr.mxu0 0.0
          %579 = vmatpush1.msra.mxu0 0.0
          %580 = vmatprep.subr.mxu0 0.0
          %581 = vmatpush1.msra.mxu0 0.0
          %582 = vmatprep.subr.mxu0 0.0
          %583 = vmatpush1.msra.mxu0 0.0
          %584 = vmatprep.subr.mxu0 0.0
          %585 = vmatpush1.msra.mxu0 0.0
          %586 = vmatprep.subr.mxu0 0.0
          %587 = vmatpush1.msra.mxu0 0.0
          %588 = vmatprep.subr.mxu0 0.0
          %589 = vmatpush1.msra.mxu0 0.0
          %590 = vmatprep.subr.mxu0 0.0
          %591 = vmatpush1.msra.mxu0 0.0
          %592 = vmatprep.subr.mxu0 0.0
          %593 = vmatpush1.msra.mxu0 0.0
          %594 = vmatprep.subr.mxu0 0.0
          %595 = vmatpush1.msra.mxu0 0.0
          %596 = vmatprep.subr.mxu0 0.0
          %597 = vmatpush1.msra.mxu0 0.0
          %598 = vmatprep.subr.mxu0 0.0
          %599 = vmatpush1.msra.mxu0 0.0
          %600 = vmatprep.mubr.f32.mxu0 0.0
          %601 = vmatmul.mubr.f32.gmra.mrb[0].mxu0 %v260
          %v602 = vpop.f32.mrb[0].mxu0
          %v603 = vadd.f32 0.0, %v602
          %v604 = vpop.f32.mrb[0].mxu0
          %605 = vmatprep.mubr.f32.mxu0 0.0
          %606 = vmatmul.mubr.f32.gmra.mrb[0].mxu0 %v261
          %v607 = vpop.f32.mrb[0].mxu0
          %v608 = vadd.f32 0.0, %v607
          %v609 = vpop.f32.mrb[0].mxu0
          %610 = vmatprep.mubr.f32.mxu0 0.0
          %611 = vmatmul.mubr.f32.gmra.mrb[0].mxu0 %v262
          %v612 = vpop.f32.mrb[0].mxu0
          %v613 = vadd.f32 0.0, %v612
          %v614 = vpop.f32.mrb[0].mxu0
          %615 = vmatprep.mubr.f32.mxu0 0.0
          %616 = vmatmul.mubr.f32.gmra.mrb[0].mxu0 %v263
          %v617 = vpop.f32.mrb[0].mxu0
          %v618 = vadd.f32 0.0, %v617
          %v619 = vpop.f32.mrb[0].mxu0
          %620 = vmatprep.mubr.f32.mxu0 0.0
          %621 = vmatmul.mubr.f32.gmra.mrb[0].mxu0 %v264
          %v622 = vpop.f32.mrb[0].mxu0
          %v623 = vadd.f32 0.0, %v622
          %v624 = vpop.f32.mrb[0].mxu0
          %625 = vmatprep.mubr.f32.mxu0 0.0
          %626 = vmatmul.mubr.f32.gmra.mrb[0].mxu0 %v265
          %v627 = vpop.f32.mrb[0].mxu0
          %v628 = vadd.f32 0.0, %v627
          %v629 = vpop.f32.mrb[0].mxu0
          %630 = vmatprep.mubr.f32.mxu0 0.0
          %631 = vmatmul.mubr.f32.gmra.mrb[0].mxu0 %v266
          %v632 = vpop.f32.mrb[0].mxu0
          %v633 = vadd.f32 0.0, %v632
          %v634 = vpop.f32.mrb[0].mxu0
          %635 = vmatprep.mubr.f32.mxu0 0.0
          %636 = vmatmul.mubr.f32.gmra.mrb[0].mxu0 %v267
          %v637 = vpop.f32.mrb[0].mxu0
          %v638 = vadd.f32 0.0, %v637
          %v639 = vpop.f32.mrb[0].mxu0
          %640 = vmatprep.mubr.f32.mxu0 0.0
          %641 = vmatmul.mubr.f32.gmra.mrb[0].mxu0 %v268
          %v642 = vpop.f32.mrb[0].mxu0
          %v643 = vadd.f32 0.0, %v642
          %v644 = vpop.f32.mrb[0].mxu0
          %645 = vmatprep.mubr.f32.mxu0 0.0
          %646 = vmatmul.mubr.f32.gmra.mrb[0].mxu0 %v269
          %v647 = vpop.f32.mrb[0].mxu0
          %v648 = vadd.f32 0.0, %v647
          %v649 = vpop.f32.mrb[0].mxu0
          %650 = vmatprep.mubr.f32.mxu0 0.0
          %651 = vmatmul.mubr.f32.gmra.mrb[0].mxu0 %v270
          %v652 = vpop.f32.mrb[0].mxu0
          %v653 = vadd.f32 0.0, %v652
          %v654 = vpop.f32.mrb[0].mxu0
          %655 = vmatprep.mubr.f32.mxu0 0.0
          %656 = vmatmul.mubr.f32.gmra.mrb[0].mxu0 %v271
          %v657 = vpop.f32.mrb[0].mxu0
          %v658 = vadd.f32 0.0, %v657
          %v659 = vpop.f32.mrb[0].mxu0
          %660 = vmatprep.mubr.f32.mxu0 0.0
          %661 = vmatmul.mubr.f32.gmra.mrb[0].mxu0 %v272
          %v662 = vpop.f32.mrb[0].mxu0
          %v663 = vadd.f32 0.0, %v662
          %v664 = vpop.f32.mrb[0].mxu0
          %665 = vmatprep.mubr.f32.mxu0 0.0
          %666 = vmatmul.mubr.f32.gmra.mrb[0].mxu0 %v273
          %v667 = vpop.f32.mrb[0].mxu0
          %v668 = vadd.f32 0.0, %v667
          %v669 = vpop.f32.mrb[0].mxu0
          %670 = vmatprep.mubr.f32.mxu0 0.0
          %671 = vmatmul.mubr.f32.gmra.mrb[0].mxu0 %v274
          %v672 = vpop.f32.mrb[0].mxu0
          %v673 = vadd.f32 0.0, %v672
          %v674 = vpop.f32.mrb[0].mxu0
          %675 = vmatprep.mubr.f32.mxu0 0.0
          %676 = vmatmul.mubr.f32.gmra.mrb[0].mxu0 %v275
          %v677 = vpop.f32.mrb[0].mxu0
          %v678 = vadd.f32 0.0, %v677
          %v679 = vpop.f32.mrb[0].mxu0
          %680 = vdwg.mxu0
          %v681 = vmul.f32 %v603, 2.0
          %v682 = vmul.f32 %v608, 2.0
          %v683 = vmul.f32 %v613, 2.0
          %v684 = vmul.f32 %v618, 2.0
          %v685 = vmul.f32 %v623, 2.0
          %v686 = vmul.f32 %v628, 2.0
          %v687 = vmul.f32 %v633, 2.0
          %v688 = vmul.f32 %v638, 2.0
          %v689 = vmul.f32 %v643, 2.0
          %v690 = vmul.f32 %v648, 2.0
          %v691 = vmul.f32 %v653, 2.0
          %v692 = vmul.f32 %v658, 2.0
          %v693 = vmul.f32 %v663, 2.0
          %v694 = vmul.f32 %v668, 2.0
          %v695 = vmul.f32 %v673, 2.0
          %v696 = vmul.f32 %v678, 2.0
          %v697 = vsub.f32 %v681, %v520
          %v698 = vsub.f32 %v682, %v521
          %v699 = vsub.f32 %v683, %v522
          %v700 = vsub.f32 %v684, %v523
          %v701 = vsub.f32 %v685, %v524
          %v702 = vsub.f32 %v686, %v525
          %v703 = vsub.f32 %v687, %v526
          %v704 = vsub.f32 %v688, %v527
          %v705 = vsub.f32 %v689, %v528
          %v706 = vsub.f32 %v690, %v529
          %v707 = vsub.f32 %v691, %v530
          %v708 = vsub.f32 %v692, %v531
          %v709 = vsub.f32 %v693, %v532
          %v710 = vsub.f32 %v694, %v533
          %v711 = vsub.f32 %v695, %v534
          %v712 = vsub.f32 %v696, %v535
          %s713 = sadd.s32 %s24, 1
          %s714 = smul.u32 %s713, 128
          %s715 = sadd.s32 %s259, %s714
          %s716 = scalar_lea.vmem [#allocation2], %s715
          %vm717 = vcmask 31744
          %718 = vst.msk [vmem:[%s716] sm:$0xff] %vm717, %v697
          %719 = vst.msk [vmem:[%s716 + $0x8] sm:$0xff] %vm717, %v698
          %720 = vst.msk [vmem:[%s716 + $0x10] sm:$0xff] %vm717, %v699
          %721 = vst.msk [vmem:[%s716 + $0x18] sm:$0xff] %vm717, %v700
          %722 = vst.msk [vmem:[%s716 + $0x20] sm:$0xff] %vm717, %v701
          %723 = vst.msk [vmem:[%s716 + $0x28] sm:$0xff] %vm717, %v702
          %724 = vst.msk [vmem:[%s716 + $0x30] sm:$0xff] %vm717, %v703
          %725 = vst.msk [vmem:[%s716 + $0x38] sm:$0xff] %vm717, %v704
          %726 = vst.msk [vmem:[%s716 + $0x40] sm:$0xff] %vm717, %v705
          %727 = vst.msk [vmem:[%s716 + $0x48] sm:$0xff] %vm717, %v706
          %728 = vst.msk [vmem:[%s716 + $0x50] sm:$0xff] %vm717, %v707
          %729 = vst.msk [vmem:[%s716 + $0x58] sm:$0xff] %vm717, %v708
          %730 = vst.msk [vmem:[%s716 + $0x60] sm:$0xff] %vm717, %v709
          %731 = vst.msk [vmem:[%s716 + $0x68] sm:$0xff] %vm717, %v710
          %732 = vst.msk [vmem:[%s716 + $0x70] sm:$0xff] %vm717, %v711
          %733 = vst.msk [vmem:[%s716 + $0x78] sm:$0xff] %vm717, %v712
        $region52: #{tpu_custom_call.1} parent=43 // pred_fallthru
          _
        %p734 = scmp.eq.s32.totalorder %s24, 2
        // Predicated region
        $region53: #{tpu_custom_call.1} parent=43 // pred_check
          %p735 = pneg %p734
        $region54: #{tpu_custom_call.1} parent=43 // pred_check_branch
          %737 = sbr.rel (%p735) target = $region56
        $region55: #{tpu_custom_call.1} parent=43 // pred_region
          %s738 = scalar_lea.vmem [#allocation2], %s259
          %v739 = vld [vmem:[%s738] sm:$0xff]
          %v740 = vld [vmem:[%s738 + $0x8] sm:$0xff]
          %v741 = vld [vmem:[%s738 + $0x10] sm:$0xff]
          %v742 = vld [vmem:[%s738 + $0x18] sm:$0xff]
          %v743 = vld [vmem:[%s738 + $0x20] sm:$0xff]
          %v744 = vld [vmem:[%s738 + $0x28] sm:$0xff]
          %v745 = vld [vmem:[%s738 + $0x30] sm:$0xff]
          %v746 = vld [vmem:[%s738 + $0x38] sm:$0xff]
          %v747 = vld [vmem:[%s738 + $0x40] sm:$0xff]
          %v748 = vld [vmem:[%s738 + $0x48] sm:$0xff]
          %v749 = vld [vmem:[%s738 + $0x50] sm:$0xff]
          %v750 = vld [vmem:[%s738 + $0x58] sm:$0xff]
          %v751 = vld [vmem:[%s738 + $0x60] sm:$0xff]
          %v752 = vld [vmem:[%s738 + $0x68] sm:$0xff]
          %v753 = vld [vmem:[%s738 + $0x70] sm:$0xff]
          %v754 = vld [vmem:[%s738 + $0x78] sm:$0xff]
          %v755 = vld [vmem:[%s2] sm:$0xff]
          %s756 = sadd.s32 %s259, 128
          %s757 = scalar_lea.vmem [#allocation2], %s756
          %v758 = vld [vmem:[%s757] sm:$0xff]
          %v759 = vld [vmem:[%s757 + $0x8] sm:$0xff]
          %v760 = vld [vmem:[%s757 + $0x10] sm:$0xff]
          %v761 = vld [vmem:[%s757 + $0x18] sm:$0xff]
          %v762 = vld [vmem:[%s757 + $0x20] sm:$0xff]
          %v763 = vld [vmem:[%s757 + $0x28] sm:$0xff]
          %v764 = vld [vmem:[%s757 + $0x30] sm:$0xff]
          %v765 = vld [vmem:[%s757 + $0x38] sm:$0xff]
          %v766 = vld [vmem:[%s757 + $0x40] sm:$0xff]
          %v767 = vld [vmem:[%s757 + $0x48] sm:$0xff]
          %v768 = vld [vmem:[%s757 + $0x50] sm:$0xff]
          %v769 = vld [vmem:[%s757 + $0x58] sm:$0xff]
          %v770 = vld [vmem:[%s757 + $0x60] sm:$0xff]
          %v771 = vld [vmem:[%s757 + $0x68] sm:$0xff]
          %v772 = vld [vmem:[%s757 + $0x70] sm:$0xff]
          %v773 = vld [vmem:[%s757 + $0x78] sm:$0xff]
          %s774 = scalar_lea.vmem %s2, 8
          %v775 = vld [vmem:[%s774] sm:$0xff]
          %v777 = vcombine.high %v775, %v775
          %vm778 = vcmask 31744
          %v780 = vsel %vm778, %v758, 0
          %v783 = vsel %vm778, %v759, 0
          %v786 = vsel %vm778, %v760, 0
          %v789 = vsel %vm778, %v761, 0
          %v792 = vsel %vm778, %v762, 0
          %v795 = vsel %vm778, %v763, 0
          %v798 = vsel %vm778, %v764, 0
          %v801 = vsel %vm778, %v765, 0
          %v804 = vsel %vm778, %v766, 0
          %v807 = vsel %vm778, %v767, 0
          %v810 = vsel %vm778, %v768, 0
          %v813 = vsel %vm778, %v769, 0
          %v816 = vsel %vm778, %v770, 0
          %v819 = vsel %vm778, %v771, 0
          %v822 = vsel %vm778, %v772, 0
          %v825 = vsel %vm778, %v773, 0
          %vm827 = vcmask 1043456
          %v828 = vsel %vm827, %v775, 0
          %v830 = vsel %vm827, %v777, 0
          %832 = vmatprep.subr.mxu0 %v830
          %833 = vmatpush1.msra.mxu0 %v828
          %834 = vmatprep.subr.mxu0 0.0
          %835 = vmatpush1.msra.mxu0 0.0
          %836 = vmatprep.subr.mxu0 0.0
          %837 = vmatpush1.msra.mxu0 0.0
          %838 = vmatprep.subr.mxu0 0.0
          %839 = vmatpush1.msra.mxu0 0.0
          %840 = vmatprep.subr.mxu0 0.0
          %841 = vmatpush1.msra.mxu0 0.0
          %842 = vmatprep.subr.mxu0 0.0
          %843 = vmatpush1.msra.mxu0 0.0
          %844 = vmatprep.subr.mxu0 0.0
          %845 = vmatpush1.msra.mxu0 0.0
          %846 = vmatprep.subr.mxu0 0.0
          %847 = vmatpush1.msra.mxu0 0.0
          %848 = vmatprep.subr.mxu0 0.0
          %849 = vmatpush1.msra.mxu0 0.0
          %850 = vmatprep.subr.mxu0 0.0
          %851 = vmatpush1.msra.mxu0 0.0
          %852 = vmatprep.subr.mxu0 0.0
          %853 = vmatpush1.msra.mxu0 0.0
          %854 = vmatprep.subr.mxu0 0.0
          %855 = vmatpush1.msra.mxu0 0.0
          %856 = vmatprep.subr.mxu0 0.0
          %857 = vmatpush1.msra.mxu0 0.0
          %858 = vmatprep.subr.mxu0 0.0
          %859 = vmatpush1.msra.mxu0 0.0
          %860 = vmatprep.subr.mxu0 0.0
          %861 = vmatpush1.msra.mxu0 0.0
          %862 = vmatprep.subr.mxu0 0.0
          %863 = vmatpush1.msra.mxu0 0.0
          %864 = vmatprep.subr.mxu0 0.0
          %865 = vmatpush1.msra.mxu0 0.0
          %866 = vmatprep.subr.mxu0 0.0
          %867 = vmatpush1.msra.mxu0 0.0
          %868 = vmatprep.subr.mxu0 0.0
          %869 = vmatpush1.msra.mxu0 0.0
          %870 = vmatprep.subr.mxu0 0.0
          %871 = vmatpush1.msra.mxu0 0.0
          %872 = vmatprep.subr.mxu0 0.0
          %873 = vmatpush1.msra.mxu0 0.0
          %874 = vmatprep.subr.mxu0 0.0
          %875 = vmatpush1.msra.mxu0 0.0
          %876 = vmatprep.subr.mxu0 0.0
          %877 = vmatpush1.msra.mxu0 0.0
          %878 = vmatprep.subr.mxu0 0.0
          %879 = vmatpush1.msra.mxu0 0.0
          %880 = vmatprep.subr.mxu0 0.0
          %881 = vmatpush1.msra.mxu0 0.0
          %882 = vmatprep.subr.mxu0 0.0
          %883 = vmatpush1.msra.mxu0 0.0
          %884 = vmatprep.subr.mxu0 0.0
          %885 = vmatpush1.msra.mxu0 0.0
          %886 = vmatprep.subr.mxu0 0.0
          %887 = vmatpush1.msra.mxu0 0.0
          %888 = vmatprep.subr.mxu0 0.0
          %889 = vmatpush1.msra.mxu0 0.0
          %890 = vmatprep.subr.mxu0 0.0
          %891 = vmatpush1.msra.mxu0 0.0
          %892 = vmatprep.subr.mxu0 0.0
          %893 = vmatpush1.msra.mxu0 0.0
          %894 = vmatprep.subr.mxu0 0.0
          %895 = vmatpush1.msra.mxu0 0.0
          %896 = vmatprep.mubr.f32.mxu0 0.0
          %897 = vmatmul.mubr.f32.gmra.mrb[0].mxu0 %v780
          %v898 = vpop.f32.mrb[0].mxu0
          %v899 = vadd.f32 0.0, %v898
          %v900 = vpop.f32.mrb[0].mxu0
          %v901 = vadd.f32 0.0, %v900
          %902 = vmatprep.mubr.f32.mxu0 0.0
          %903 = vmatmul.mubr.f32.gmra.mrb[0].mxu0 %v783
          %v904 = vpop.f32.mrb[0].mxu0
          %v905 = vadd.f32 0.0, %v904
          %v906 = vpop.f32.mrb[0].mxu0
          %v907 = vadd.f32 0.0, %v906
          %908 = vmatprep.mubr.f32.mxu0 0.0
          %909 = vmatmul.mubr.f32.gmra.mrb[0].mxu0 %v786
          %v910 = vpop.f32.mrb[0].mxu0
          %v911 = vadd.f32 0.0, %v910
          %v912 = vpop.f32.mrb[0].mxu0
          %v913 = vadd.f32 0.0, %v912
          %914 = vmatprep.mubr.f32.mxu0 0.0
          %915 = vmatmul.mubr.f32.gmra.mrb[0].mxu0 %v789
          %v916 = vpop.f32.mrb[0].mxu0
          %v917 = vadd.f32 0.0, %v916
          %v918 = vpop.f32.mrb[0].mxu0
          %v919 = vadd.f32 0.0, %v918
          %920 = vmatprep.mubr.f32.mxu0 0.0
          %921 = vmatmul.mubr.f32.gmra.mrb[0].mxu0 %v792
          %v922 = vpop.f32.mrb[0].mxu0
          %v923 = vadd.f32 0.0, %v922
          %v924 = vpop.f32.mrb[0].mxu0
          %v925 = vadd.f32 0.0, %v924
          %926 = vmatprep.mubr.f32.mxu0 0.0
          %927 = vmatmul.mubr.f32.gmra.mrb[0].mxu0 %v795
          %v928 = vpop.f32.mrb[0].mxu0
          %v929 = vadd.f32 0.0, %v928
          %v930 = vpop.f32.mrb[0].mxu0
          %v931 = vadd.f32 0.0, %v930
          %932 = vmatprep.mubr.f32.mxu0 0.0
          %933 = vmatmul.mubr.f32.gmra.mrb[0].mxu0 %v798
          %v934 = vpop.f32.mrb[0].mxu0
          %v935 = vadd.f32 0.0, %v934
          %v936 = vpop.f32.mrb[0].mxu0
          %v937 = vadd.f32 0.0, %v936
          %938 = vmatprep.mubr.f32.mxu0 0.0
          %939 = vmatmul.mubr.f32.gmra.mrb[0].mxu0 %v801
          %v940 = vpop.f32.mrb[0].mxu0
          %v941 = vadd.f32 0.0, %v940
          %v942 = vpop.f32.mrb[0].mxu0
          %v943 = vadd.f32 0.0, %v942
          %944 = vmatprep.mubr.f32.mxu0 0.0
          %945 = vmatmul.mubr.f32.gmra.mrb[0].mxu0 %v804
          %v946 = vpop.f32.mrb[0].mxu0
          %v947 = vadd.f32 0.0, %v946
          %v948 = vpop.f32.mrb[0].mxu0
          %v949 = vadd.f32 0.0, %v948
          %950 = vmatprep.mubr.f32.mxu0 0.0
          %951 = vmatmul.mubr.f32.gmra.mrb[0].mxu0 %v807
          %v952 = vpop.f32.mrb[0].mxu0
          %v953 = vadd.f32 0.0, %v952
          %v954 = vpop.f32.mrb[0].mxu0
          %v955 = vadd.f32 0.0, %v954
          %956 = vmatprep.mubr.f32.mxu0 0.0
          %957 = vmatmul.mubr.f32.gmra.mrb[0].mxu0 %v810
          %v958 = vpop.f32.mrb[0].mxu0
          %v959 = vadd.f32 0.0, %v958
          %v960 = vpop.f32.mrb[0].mxu0
          %v961 = vadd.f32 0.0, %v960
          %962 = vmatprep.mubr.f32.mxu0 0.0
          %963 = vmatmul.mubr.f32.gmra.mrb[0].mxu0 %v813
          %v964 = vpop.f32.mrb[0].mxu0
          %v965 = vadd.f32 0.0, %v964
          %v966 = vpop.f32.mrb[0].mxu0
          %v967 = vadd.f32 0.0, %v966
          %968 = vmatprep.mubr.f32.mxu0 0.0
          %969 = vmatmul.mubr.f32.gmra.mrb[0].mxu0 %v816
          %v970 = vpop.f32.mrb[0].mxu0
          %v971 = vadd.f32 0.0, %v970
          %v972 = vpop.f32.mrb[0].mxu0
          %v973 = vadd.f32 0.0, %v972
          %974 = vmatprep.mubr.f32.mxu0 0.0
          %975 = vmatmul.mubr.f32.gmra.mrb[0].mxu0 %v819
          %v976 = vpop.f32.mrb[0].mxu0
          %v977 = vadd.f32 0.0, %v976
          %v978 = vpop.f32.mrb[0].mxu0
          %v979 = vadd.f32 0.0, %v978
          %980 = vmatprep.mubr.f32.mxu0 0.0
          %981 = vmatmul.mubr.f32.gmra.mrb[0].mxu0 %v822
          %v982 = vpop.f32.mrb[0].mxu0
          %v983 = vadd.f32 0.0, %v982
          %v984 = vpop.f32.mrb[0].mxu0
          %v985 = vadd.f32 0.0, %v984
          %986 = vmatprep.mubr.f32.mxu0 0.0
          %987 = vmatmul.mubr.f32.gmra.mrb[0].mxu0 %v825
          %v988 = vpop.f32.mrb[0].mxu0
          %v989 = vadd.f32 0.0, %v988
          %v990 = vpop.f32.mrb[0].mxu0
          %v991 = vadd.f32 0.0, %v990
          %992 = vdwg.mxu0
          %v994 = vcombine.high %v755, %v755
          %v996 = vsel %vm778, %v739, 0
          %v999 = vsel %vm778, %v740, 0
          %v1002 = vsel %vm778, %v741, 0
          %v1005 = vsel %vm778, %v742, 0
          %v1008 = vsel %vm778, %v743, 0
          %v1011 = vsel %vm778, %v744, 0
          %v1014 = vsel %vm778, %v745, 0
          %v1017 = vsel %vm778, %v746, 0
          %v1020 = vsel %vm778, %v747, 0
          %v1023 = vsel %vm778, %v748, 0
          %v1026 = vsel %vm778, %v749, 0
          %v1029 = vsel %vm778, %v750, 0
          %v1032 = vsel %vm778, %v751, 0
          %v1035 = vsel %vm778, %v752, 0
          %v1038 = vsel %vm778, %v753, 0
          %v1041 = vsel %vm778, %v754, 0
          %v1043 = vsel %vm827, %v755, 0
          %v1045 = vsel %vm827, %v994, 0
          %1047 = vmatprep.subr.mxu0 %v1045
          %1048 = vmatpush1.msra.mxu0 %v1043
          %1049 = vmatprep.subr.mxu0 0.0
          %1050 = vmatpush1.msra.mxu0 0.0
          %1051 = vmatprep.subr.mxu0 0.0
          %1052 = vmatpush1.msra.mxu0 0.0
          %1053 = vmatprep.subr.mxu0 0.0
          %1054 = vmatpush1.msra.mxu0 0.0
          %1055 = vmatprep.subr.mxu0 0.0
          %1056 = vmatpush1.msra.mxu0 0.0
          %1057 = vmatprep.subr.mxu0 0.0
          %1058 = vmatpush1.msra.mxu0 0.0
          %1059 = vmatprep.subr.mxu0 0.0
          %1060 = vmatpush1.msra.mxu0 0.0
          %1061 = vmatprep.subr.mxu0 0.0
          %1062 = vmatpush1.msra.mxu0 0.0
          %1063 = vmatprep.subr.mxu0 0.0
          %1064 = vmatpush1.msra.mxu0 0.0
          %1065 = vmatprep.subr.mxu0 0.0
          %1066 = vmatpush1.msra.mxu0 0.0
          %1067 = vmatprep.subr.mxu0 0.0
          %1068 = vmatpush1.msra.mxu0 0.0
          %1069 = vmatprep.subr.mxu0 0.0
          %1070 = vmatpush1.msra.mxu0 0.0
          %1071 = vmatprep.subr.mxu0 0.0
          %1072 = vmatpush1.msra.mxu0 0.0
          %1073 = vmatprep.subr.mxu0 0.0
          %1074 = vmatpush1.msra.mxu0 0.0
          %1075 = vmatprep.subr.mxu0 0.0
          %1076 = vmatpush1.msra.mxu0 0.0
          %1077 = vmatprep.subr.mxu0 0.0
          %1078 = vmatpush1.msra.mxu0 0.0
          %1079 = vmatprep.subr.mxu0 0.0
          %1080 = vmatpush1.msra.mxu0 0.0
          %1081 = vmatprep.subr.mxu0 0.0
          %1082 = vmatpush1.msra.mxu0 0.0
          %1083 = vmatprep.subr.mxu0 0.0
          %1084 = vmatpush1.msra.mxu0 0.0
          %1085 = vmatprep.subr.mxu0 0.0
          %1086 = vmatpush1.msra.mxu0 0.0
          %1087 = vmatprep.subr.mxu0 0.0
          %1088 = vmatpush1.msra.mxu0 0.0
          %1089 = vmatprep.subr.mxu0 0.0
          %1090 = vmatpush1.msra.mxu0 0.0
          %1091 = vmatprep.subr.mxu0 0.0
          %1092 = vmatpush1.msra.mxu0 0.0
          %1093 = vmatprep.subr.mxu0 0.0
          %1094 = vmatpush1.msra.mxu0 0.0
          %1095 = vmatprep.subr.mxu0 0.0
          %1096 = vmatpush1.msra.mxu0 0.0
          %1097 = vmatprep.subr.mxu0 0.0
          %1098 = vmatpush1.msra.mxu0 0.0
          %1099 = vmatprep.subr.mxu0 0.0
          %1100 = vmatpush1.msra.mxu0 0.0
          %1101 = vmatprep.subr.mxu0 0.0
          %1102 = vmatpush1.msra.mxu0 0.0
          %1103 = vmatprep.subr.mxu0 0.0
          %1104 = vmatpush1.msra.mxu0 0.0
          %1105 = vmatprep.subr.mxu0 0.0
          %1106 = vmatpush1.msra.mxu0 0.0
          %1107 = vmatprep.subr.mxu0 0.0
          %1108 = vmatpush1.msra.mxu0 0.0
          %1109 = vmatprep.subr.mxu0 0.0
          %1110 = vmatpush1.msra.mxu0 0.0
          %1111 = vmatprep.mubr.f32.mxu0 0.0
          %1112 = vmatmul.mubr.f32.gmra.mrb[0].mxu0 %v996
          %v1113 = vpop.f32.mrb[0].mxu0
          %v1114 = vadd.f32 %v899, %v1113
          %v1115 = vpop.f32.mrb[0].mxu0
          %v1116 = vadd.f32 %v901, %v1115
          %1117 = vmatprep.mubr.f32.mxu0 0.0
          %1118 = vmatmul.mubr.f32.gmra.mrb[0].mxu0 %v999
          %v1119 = vpop.f32.mrb[0].mxu0
          %v1120 = vadd.f32 %v905, %v1119
          %v1121 = vpop.f32.mrb[0].mxu0
          %v1122 = vadd.f32 %v907, %v1121
          %1123 = vmatprep.mubr.f32.mxu0 0.0
          %1124 = vmatmul.mubr.f32.gmra.mrb[0].mxu0 %v1002
          %v1125 = vpop.f32.mrb[0].mxu0
          %v1126 = vadd.f32 %v911, %v1125
          %v1127 = vpop.f32.mrb[0].mxu0
          %v1128 = vadd.f32 %v913, %v1127
          %1129 = vmatprep.mubr.f32.mxu0 0.0
          %1130 = vmatmul.mubr.f32.gmra.mrb[0].mxu0 %v1005
          %v1131 = vpop.f32.mrb[0].mxu0
          %v1132 = vadd.f32 %v917, %v1131
          %v1133 = vpop.f32.mrb[0].mxu0
          %v1134 = vadd.f32 %v919, %v1133
          %1135 = vmatprep.mubr.f32.mxu0 0.0
          %1136 = vmatmul.mubr.f32.gmra.mrb[0].mxu0 %v1008
          %v1137 = vpop.f32.mrb[0].mxu0
          %v1138 = vadd.f32 %v923, %v1137
          %v1139 = vpop.f32.mrb[0].mxu0
          %v1140 = vadd.f32 %v925, %v1139
          %1141 = vmatprep.mubr.f32.mxu0 0.0
          %1142 = vmatmul.mubr.f32.gmra.mrb[0].mxu0 %v1011
          %v1143 = vpop.f32.mrb[0].mxu0
          %v1144 = vadd.f32 %v929, %v1143
          %v1145 = vpop.f32.mrb[0].mxu0
          %v1146 = vadd.f32 %v931, %v1145
          %1147 = vmatprep.mubr.f32.mxu0 0.0
          %1148 = vmatmul.mubr.f32.gmra.mrb[0].mxu0 %v1014
          %v1149 = vpop.f32.mrb[0].mxu0
          %v1150 = vadd.f32 %v935, %v1149
          %v1151 = vpop.f32.mrb[0].mxu0
          %v1152 = vadd.f32 %v937, %v1151
          %1153 = vmatprep.mubr.f32.mxu0 0.0
          %1154 = vmatmul.mubr.f32.gmra.mrb[0].mxu0 %v1017
          %v1155 = vpop.f32.mrb[0].mxu0
          %v1156 = vadd.f32 %v941, %v1155
          %v1157 = vpop.f32.mrb[0].mxu0
          %v1158 = vadd.f32 %v943, %v1157
          %1159 = vmatprep.mubr.f32.mxu0 0.0
          %1160 = vmatmul.mubr.f32.gmra.mrb[0].mxu0 %v1020
          %v1161 = vpop.f32.mrb[0].mxu0
          %v1162 = vadd.f32 %v947, %v1161
          %v1163 = vpop.f32.mrb[0].mxu0
          %v1164 = vadd.f32 %v949, %v1163
          %1165 = vmatprep.mubr.f32.mxu0 0.0
          %1166 = vmatmul.mubr.f32.gmra.mrb[0].mxu0 %v1023
          %v1167 = vpop.f32.mrb[0].mxu0
          %v1168 = vadd.f32 %v953, %v1167
          %v1169 = vpop.f32.mrb[0].mxu0
          %v1170 = vadd.f32 %v955, %v1169
          %1171 = vmatprep.mubr.f32.mxu0 0.0
          %1172 = vmatmul.mubr.f32.gmra.mrb[0].mxu0 %v1026
          %v1173 = vpop.f32.mrb[0].mxu0
          %v1174 = vadd.f32 %v959, %v1173
          %v1175 = vpop.f32.mrb[0].mxu0
          %v1176 = vadd.f32 %v961, %v1175
          %1177 = vmatprep.mubr.f32.mxu0 0.0
          %1178 = vmatmul.mubr.f32.gmra.mrb[0].mxu0 %v1029
          %v1179 = vpop.f32.mrb[0].mxu0
          %v1180 = vadd.f32 %v965, %v1179
          %v1181 = vpop.f32.mrb[0].mxu0
          %v1182 = vadd.f32 %v967, %v1181
          %1183 = vmatprep.mubr.f32.mxu0 0.0
          %1184 = vmatmul.mubr.f32.gmra.mrb[0].mxu0 %v1032
          %v1185 = vpop.f32.mrb[0].mxu0
          %v1186 = vadd.f32 %v971, %v1185
          %v1187 = vpop.f32.mrb[0].mxu0
          %v1188 = vadd.f32 %v973, %v1187
          %1189 = vmatprep.mubr.f32.mxu0 0.0
          %1190 = vmatmul.mubr.f32.gmra.mrb[0].mxu0 %v1035
          %v1191 = vpop.f32.mrb[0].mxu0
          %v1192 = vadd.f32 %v977, %v1191
          %v1193 = vpop.f32.mrb[0].mxu0
          %v1194 = vadd.f32 %v979, %v1193
          %1195 = vmatprep.mubr.f32.mxu0 0.0
          %1196 = vmatmul.mubr.f32.gmra.mrb[0].mxu0 %v1038
          %v1197 = vpop.f32.mrb[0].mxu0
          %v1198 = vadd.f32 %v983, %v1197
          %v1199 = vpop.f32.mrb[0].mxu0
          %v1200 = vadd.f32 %v985, %v1199
          %1201 = vmatprep.mubr.f32.mxu0 0.0
          %1202 = vmatmul.mubr.f32.gmra.mrb[0].mxu0 %v1041
          %v1203 = vpop.f32.mrb[0].mxu0
          %v1204 = vadd.f32 %v989, %v1203
          %v1205 = vpop.f32.mrb[0].mxu0
          %v1206 = vadd.f32 %v991, %v1205
          %1207 = vdwg.mxu0
          %s1208 = sadd.s32 %s259, 256
          %s1209 = scalar_lea.vmem [#allocation2], %s1208
          %v1210 = vld [vmem:[%s1209] sm:$0xff]
          %v1211 = vld [vmem:[%s1209 + $0x8] sm:$0xff]
          %v1212 = vld [vmem:[%s1209 + $0x10] sm:$0xff]
          %v1213 = vld [vmem:[%s1209 + $0x18] sm:$0xff]
          %v1214 = vld [vmem:[%s1209 + $0x20] sm:$0xff]
          %v1215 = vld [vmem:[%s1209 + $0x28] sm:$0xff]
          %v1216 = vld [vmem:[%s1209 + $0x30] sm:$0xff]
          %v1217 = vld [vmem:[%s1209 + $0x38] sm:$0xff]
          %v1218 = vld [vmem:[%s1209 + $0x40] sm:$0xff]
          %v1219 = vld [vmem:[%s1209 + $0x48] sm:$0xff]
          %v1220 = vld [vmem:[%s1209 + $0x50] sm:$0xff]
          %v1221 = vld [vmem:[%s1209 + $0x58] sm:$0xff]
          %v1222 = vld [vmem:[%s1209 + $0x60] sm:$0xff]
          %v1223 = vld [vmem:[%s1209 + $0x68] sm:$0xff]
          %v1224 = vld [vmem:[%s1209 + $0x70] sm:$0xff]
          %v1225 = vld [vmem:[%s1209 + $0x78] sm:$0xff]
          %s1226 = scalar_lea.vmem %s2, 16
          %v1227 = vld [vmem:[%s1226] sm:$0xff]
          %v1229 = vcombine.high %v1227, %v1227
          %v1231 = vsel %vm778, %v1210, 0
          %v1234 = vsel %vm778, %v1211, 0
          %v1237 = vsel %vm778, %v1212, 0
          %v1240 = vsel %vm778, %v1213, 0
          %v1243 = vsel %vm778, %v1214, 0
          %v1246 = vsel %vm778, %v1215, 0
          %v1249 = vsel %vm778, %v1216, 0
          %v1252 = vsel %vm778, %v1217, 0
          %v1255 = vsel %vm778, %v1218, 0
          %v1258 = vsel %vm778, %v1219, 0
          %v1261 = vsel %vm778, %v1220, 0
          %v1264 = vsel %vm778, %v1221, 0
          %v1267 = vsel %vm778, %v1222, 0
          %v1270 = vsel %vm778, %v1223, 0
          %v1273 = vsel %vm778, %v1224, 0
          %v1276 = vsel %vm778, %v1225, 0
          %v1278 = vsel %vm827, %v1227, 0
          %v1280 = vsel %vm827, %v1229, 0
          %1282 = vmatprep.subr.mxu0 %v1280
          %1283 = vmatpush1.msra.mxu0 %v1278
          %1284 = vmatprep.subr.mxu0 0.0
          %1285 = vmatpush1.msra.mxu0 0.0
          %1286 = vmatprep.subr.mxu0 0.0
          %1287 = vmatpush1.msra.mxu0 0.0
          %1288 = vmatprep.subr.mxu0 0.0
          %1289 = vmatpush1.msra.mxu0 0.0
          %1290 = vmatprep.subr.mxu0 0.0
          %1291 = vmatpush1.msra.mxu0 0.0
          %1292 = vmatprep.subr.mxu0 0.0
          %1293 = vmatpush1.msra.mxu0 0.0
          %1294 = vmatprep.subr.mxu0 0.0
          %1295 = vmatpush1.msra.mxu0 0.0
          %1296 = vmatprep.subr.mxu0 0.0
          %1297 = vmatpush1.msra.mxu0 0.0
          %1298 = vmatprep.subr.mxu0 0.0
          %1299 = vmatpush1.msra.mxu0 0.0
          %1300 = vmatprep.subr.mxu0 0.0
          %1301 = vmatpush1.msra.mxu0 0.0
          %1302 = vmatprep.subr.mxu0 0.0
          %1303 = vmatpush1.msra.mxu0 0.0
          %1304 = vmatprep.subr.mxu0 0.0
          %1305 = vmatpush1.msra.mxu0 0.0
          %1306 = vmatprep.subr.mxu0 0.0
          %1307 = vmatpush1.msra.mxu0 0.0
          %1308 = vmatprep.subr.mxu0 0.0
          %1309 = vmatpush1.msra.mxu0 0.0
          %1310 = vmatprep.subr.mxu0 0.0
          %1311 = vmatpush1.msra.mxu0 0.0
          %1312 = vmatprep.subr.mxu0 0.0
          %1313 = vmatpush1.msra.mxu0 0.0
          %1314 = vmatprep.subr.mxu0 0.0
          %1315 = vmatpush1.msra.mxu0 0.0
          %1316 = vmatprep.subr.mxu0 0.0
          %1317 = vmatpush1.msra.mxu0 0.0
          %1318 = vmatprep.subr.mxu0 0.0
          %1319 = vmatpush1.msra.mxu0 0.0
          %1320 = vmatprep.subr.mxu0 0.0
          %1321 = vmatpush1.msra.mxu0 0.0
          %1322 = vmatprep.subr.mxu0 0.0
          %1323 = vmatpush1.msra.mxu0 0.0
          %1324 = vmatprep.subr.mxu0 0.0
          %1325 = vmatpush1.msra.mxu0 0.0
          %1326 = vmatprep.subr.mxu0 0.0
          %1327 = vmatpush1.msra.mxu0 0.0
          %1328 = vmatprep.subr.mxu0 0.0
          %1329 = vmatpush1.msra.mxu0 0.0
          %1330 = vmatprep.subr.mxu0 0.0
          %1331 = vmatpush1.msra.mxu0 0.0
          %1332 = vmatprep.subr.mxu0 0.0
          %1333 = vmatpush1.msra.mxu0 0.0
          %1334 = vmatprep.subr.mxu0 0.0
          %1335 = vmatpush1.msra.mxu0 0.0
          %1336 = vmatprep.subr.mxu0 0.0
          %1337 = vmatpush1.msra.mxu0 0.0
          %1338 = vmatprep.subr.mxu0 0.0
          %1339 = vmatpush1.msra.mxu0 0.0
          %1340 = vmatprep.subr.mxu0 0.0
          %1341 = vmatpush1.msra.mxu0 0.0
          %1342 = vmatprep.subr.mxu0 0.0
          %1343 = vmatpush1.msra.mxu0 0.0
          %1344 = vmatprep.subr.mxu0 0.0
          %1345 = vmatpush1.msra.mxu0 0.0
          %1346 = vmatprep.mubr.f32.mxu0 0.0
          %1347 = vmatmul.mubr.f32.gmra.mrb[0].mxu0 %v1231
          %v1348 = vpop.f32.mrb[0].mxu0
          %v1349 = vadd.f32 0.0, %v1348
          %v1350 = vpop.f32.mrb[0].mxu0
          %v1351 = vadd.f32 0.0, %v1350
          %1352 = vmatprep.mubr.f32.mxu0 0.0
          %1353 = vmatmul.mubr.f32.gmra.mrb[0].mxu0 %v1234
          %v1354 = vpop.f32.mrb[0].mxu0
          %v1355 = vadd.f32 0.0, %v1354
          %v1356 = vpop.f32.mrb[0].mxu0
          %v1357 = vadd.f32 0.0, %v1356
          %1358 = vmatprep.mubr.f32.mxu0 0.0
          %1359 = vmatmul.mubr.f32.gmra.mrb[0].mxu0 %v1237
          %v1360 = vpop.f32.mrb[0].mxu0
          %v1361 = vadd.f32 0.0, %v1360
          %v1362 = vpop.f32.mrb[0].mxu0
          %v1363 = vadd.f32 0.0, %v1362
          %1364 = vmatprep.mubr.f32.mxu0 0.0
          %1365 = vmatmul.mubr.f32.gmra.mrb[0].mxu0 %v1240
          %v1366 = vpop.f32.mrb[0].mxu0
          %v1367 = vadd.f32 0.0, %v1366
          %v1368 = vpop.f32.mrb[0].mxu0
          %v1369 = vadd.f32 0.0, %v1368
          %1370 = vmatprep.mubr.f32.mxu0 0.0
          %1371 = vmatmul.mubr.f32.gmra.mrb[0].mxu0 %v1243
          %v1372 = vpop.f32.mrb[0].mxu0
          %v1373 = vadd.f32 0.0, %v1372
          %v1374 = vpop.f32.mrb[0].mxu0
          %v1375 = vadd.f32 0.0, %v1374
          %1376 = vmatprep.mubr.f32.mxu0 0.0
          %1377 = vmatmul.mubr.f32.gmra.mrb[0].mxu0 %v1246
          %v1378 = vpop.f32.mrb[0].mxu0
          %v1379 = vadd.f32 0.0, %v1378
          %v1380 = vpop.f32.mrb[0].mxu0
          %v1381 = vadd.f32 0.0, %v1380
          %1382 = vmatprep.mubr.f32.mxu0 0.0
          %1383 = vmatmul.mubr.f32.gmra.mrb[0].mxu0 %v1249
          %v1384 = vpop.f32.mrb[0].mxu0
          %v1385 = vadd.f32 0.0, %v1384
          %v1386 = vpop.f32.mrb[0].mxu0
          %v1387 = vadd.f32 0.0, %v1386
          %1388 = vmatprep.mubr.f32.mxu0 0.0
          %1389 = vmatmul.mubr.f32.gmra.mrb[0].mxu0 %v1252
          %v1390 = vpop.f32.mrb[0].mxu0
          %v1391 = vadd.f32 0.0, %v1390
          %v1392 = vpop.f32.mrb[0].mxu0
          %v1393 = vadd.f32 0.0, %v1392
          %1394 = vmatprep.mubr.f32.mxu0 0.0
          %1395 = vmatmul.mubr.f32.gmra.mrb[0].mxu0 %v1255
          %v1396 = vpop.f32.mrb[0].mxu0
          %v1397 = vadd.f32 0.0, %v1396
          %v1398 = vpop.f32.mrb[0].mxu0
          %v1399 = vadd.f32 0.0, %v1398
          %1400 = vmatprep.mubr.f32.mxu0 0.0
          %1401 = vmatmul.mubr.f32.gmra.mrb[0].mxu0 %v1258
          %v1402 = vpop.f32.mrb[0].mxu0
          %v1403 = vadd.f32 0.0, %v1402
          %v1404 = vpop.f32.mrb[0].mxu0
          %v1405 = vadd.f32 0.0, %v1404
          %1406 = vmatprep.mubr.f32.mxu0 0.0
          %1407 = vmatmul.mubr.f32.gmra.mrb[0].mxu0 %v1261
          %v1408 = vpop.f32.mrb[0].mxu0
          %v1409 = vadd.f32 0.0, %v1408
          %v1410 = vpop.f32.mrb[0].mxu0
          %v1411 = vadd.f32 0.0, %v1410
          %1412 = vmatprep.mubr.f32.mxu0 0.0
          %1413 = vmatmul.mubr.f32.gmra.mrb[0].mxu0 %v1264
          %v1414 = vpop.f32.mrb[0].mxu0
          %v1415 = vadd.f32 0.0, %v1414
          %v1416 = vpop.f32.mrb[0].mxu0
          %v1417 = vadd.f32 0.0, %v1416
          %1418 = vmatprep.mubr.f32.mxu0 0.0
          %1419 = vmatmul.mubr.f32.gmra.mrb[0].mxu0 %v1267
          %v1420 = vpop.f32.mrb[0].mxu0
          %v1421 = vadd.f32 0.0, %v1420
          %v1422 = vpop.f32.mrb[0].mxu0
          %v1423 = vadd.f32 0.0, %v1422
          %1424 = vmatprep.mubr.f32.mxu0 0.0
          %1425 = vmatmul.mubr.f32.gmra.mrb[0].mxu0 %v1270
          %v1426 = vpop.f32.mrb[0].mxu0
          %v1427 = vadd.f32 0.0, %v1426
          %v1428 = vpop.f32.mrb[0].mxu0
          %v1429 = vadd.f32 0.0, %v1428
          %1430 = vmatprep.mubr.f32.mxu0 0.0
          %1431 = vmatmul.mubr.f32.gmra.mrb[0].mxu0 %v1273
          %v1432 = vpop.f32.mrb[0].mxu0
          %v1433 = vadd.f32 0.0, %v1432
          %v1434 = vpop.f32.mrb[0].mxu0
          %v1435 = vadd.f32 0.0, %v1434
          %1436 = vmatprep.mubr.f32.mxu0 0.0
          %1437 = vmatmul.mubr.f32.gmra.mrb[0].mxu0 %v1276
          %v1438 = vpop.f32.mrb[0].mxu0
          %v1439 = vadd.f32 0.0, %v1438
          %v1440 = vpop.f32.mrb[0].mxu0
          %v1441 = vadd.f32 0.0, %v1440
          %1442 = vdwg.mxu0
          %v1443 = vadd.f32 %v1114, %v1349
          %v1444 = vadd.f32 %v1116, %v1351
          %v1445 = vadd.f32 %v1120, %v1355
          %v1446 = vadd.f32 %v1122, %v1357
          %v1447 = vadd.f32 %v1126, %v1361
          %v1448 = vadd.f32 %v1128, %v1363
          %v1449 = vadd.f32 %v1132, %v1367
          %v1450 = vadd.f32 %v1134, %v1369
          %v1451 = vadd.f32 %v1138, %v1373
          %v1452 = vadd.f32 %v1140, %v1375
          %v1453 = vadd.f32 %v1144, %v1379
          %v1454 = vadd.f32 %v1146, %v1381
          %v1455 = vadd.f32 %v1150, %v1385
          %v1456 = vadd.f32 %v1152, %v1387
          %v1457 = vadd.f32 %v1156, %v1391
          %v1458 = vadd.f32 %v1158, %v1393
          %v1459 = vadd.f32 %v1162, %v1397
          %v1460 = vadd.f32 %v1164, %v1399
          %v1461 = vadd.f32 %v1168, %v1403
          %v1462 = vadd.f32 %v1170, %v1405
          %v1463 = vadd.f32 %v1174, %v1409
          %v1464 = vadd.f32 %v1176, %v1411
          %v1465 = vadd.f32 %v1180, %v1415
          %v1466 = vadd.f32 %v1182, %v1417
          %v1467 = vadd.f32 %v1186, %v1421
          %v1468 = vadd.f32 %v1188, %v1423
          %v1469 = vadd.f32 %v1192, %v1427
          %v1470 = vadd.f32 %v1194, %v1429
          %v1471 = vadd.f32 %v1198, %v1433
          %v1472 = vadd.f32 %v1200, %v1435
          %v1473 = vadd.f32 %v1204, %v1439
          %v1474 = vadd.f32 %v1206, %v1441
          %s1475 = sadd.s32 %s259, 384
          %s1476 = scalar_lea.vmem [#allocation2], %s1475
          %v1477 = vld [vmem:[%s1476] sm:$0xff]
          %v1478 = vld [vmem:[%s1476 + $0x8] sm:$0xff]
          %v1479 = vld [vmem:[%s1476 + $0x10] sm:$0xff]
          %v1480 = vld [vmem:[%s1476 + $0x18] sm:$0xff]
          %v1481 = vld [vmem:[%s1476 + $0x20] sm:$0xff]
          %v1482 = vld [vmem:[%s1476 + $0x28] sm:$0xff]
          %v1483 = vld [vmem:[%s1476 + $0x30] sm:$0xff]
          %v1484 = vld [vmem:[%s1476 + $0x38] sm:$0xff]
          %v1485 = vld [vmem:[%s1476 + $0x40] sm:$0xff]
          %v1486 = vld [vmem:[%s1476 + $0x48] sm:$0xff]
          %v1487 = vld [vmem:[%s1476 + $0x50] sm:$0xff]
          %v1488 = vld [vmem:[%s1476 + $0x58] sm:$0xff]
          %v1489 = vld [vmem:[%s1476 + $0x60] sm:$0xff]
          %v1490 = vld [vmem:[%s1476 + $0x68] sm:$0xff]
          %v1491 = vld [vmem:[%s1476 + $0x70] sm:$0xff]
          %v1492 = vld [vmem:[%s1476 + $0x78] sm:$0xff]
          %s1493 = scalar_lea.vmem %s2, 24
          %v1494 = vld [vmem:[%s1493] sm:$0xff]
          %v1496 = vcombine.high %v1494, %v1494
          %v1498 = vsel %vm778, %v1477, 0
          %v1501 = vsel %vm778, %v1478, 0
          %v1504 = vsel %vm778, %v1479, 0
          %v1507 = vsel %vm778, %v1480, 0
          %v1510 = vsel %vm778, %v1481, 0
          %v1513 = vsel %vm778, %v1482, 0
          %v1516 = vsel %vm778, %v1483, 0
          %v1519 = vsel %vm778, %v1484, 0
          %v1522 = vsel %vm778, %v1485, 0
          %v1525 = vsel %vm778, %v1486, 0
          %v1528 = vsel %vm778, %v1487, 0
          %v1531 = vsel %vm778, %v1488, 0
          %v1534 = vsel %vm778, %v1489, 0
          %v1537 = vsel %vm778, %v1490, 0
          %v1540 = vsel %vm778, %v1491, 0
          %v1543 = vsel %vm778, %v1492, 0
          %v1545 = vsel %vm827, %v1494, 0
          %v1547 = vsel %vm827, %v1496, 0
          %1549 = vmatprep.subr.mxu0 %v1547
          %1550 = vmatpush1.msra.mxu0 %v1545
          %1551 = vmatprep.subr.mxu0 0.0
          %1552 = vmatpush1.msra.mxu0 0.0
          %1553 = vmatprep.subr.mxu0 0.0
          %1554 = vmatpush1.msra.mxu0 0.0
          %1555 = vmatprep.subr.mxu0 0.0
          %1556 = vmatpush1.msra.mxu0 0.0
          %1557 = vmatprep.subr.mxu0 0.0
          %1558 = vmatpush1.msra.mxu0 0.0
          %1559 = vmatprep.subr.mxu0 0.0
          %1560 = vmatpush1.msra.mxu0 0.0
          %1561 = vmatprep.subr.mxu0 0.0
          %1562 = vmatpush1.msra.mxu0 0.0
          %1563 = vmatprep.subr.mxu0 0.0
          %1564 = vmatpush1.msra.mxu0 0.0
          %1565 = vmatprep.subr.mxu0 0.0
          %1566 = vmatpush1.msra.mxu0 0.0
          %1567 = vmatprep.subr.mxu0 0.0
          %1568 = vmatpush1.msra.mxu0 0.0
          %1569 = vmatprep.subr.mxu0 0.0
          %1570 = vmatpush1.msra.mxu0 0.0
          %1571 = vmatprep.subr.mxu0 0.0
          %1572 = vmatpush1.msra.mxu0 0.0
          %1573 = vmatprep.subr.mxu0 0.0
          %1574 = vmatpush1.msra.mxu0 0.0
          %1575 = vmatprep.subr.mxu0 0.0
          %1576 = vmatpush1.msra.mxu0 0.0
          %1577 = vmatprep.subr.mxu0 0.0
          %1578 = vmatpush1.msra.mxu0 0.0
          %1579 = vmatprep.subr.mxu0 0.0
          %1580 = vmatpush1.msra.mxu0 0.0
          %1581 = vmatprep.subr.mxu0 0.0
          %1582 = vmatpush1.msra.mxu0 0.0
          %1583 = vmatprep.subr.mxu0 0.0
          %1584 = vmatpush1.msra.mxu0 0.0
          %1585 = vmatprep.subr.mxu0 0.0
          %1586 = vmatpush1.msra.mxu0 0.0
          %1587 = vmatprep.subr.mxu0 0.0
          %1588 = vmatpush1.msra.mxu0 0.0
          %1589 = vmatprep.subr.mxu0 0.0
          %1590 = vmatpush1.msra.mxu0 0.0
          %1591 = vmatprep.subr.mxu0 0.0
          %1592 = vmatpush1.msra.mxu0 0.0
          %1593 = vmatprep.subr.mxu0 0.0
          %1594 = vmatpush1.msra.mxu0 0.0
          %1595 = vmatprep.subr.mxu0 0.0
          %1596 = vmatpush1.msra.mxu0 0.0
          %1597 = vmatprep.subr.mxu0 0.0
          %1598 = vmatpush1.msra.mxu0 0.0
          %1599 = vmatprep.subr.mxu0 0.0
          %1600 = vmatpush1.msra.mxu0 0.0
          %1601 = vmatprep.subr.mxu0 0.0
          %1602 = vmatpush1.msra.mxu0 0.0
          %1603 = vmatprep.subr.mxu0 0.0
          %1604 = vmatpush1.msra.mxu0 0.0
          %1605 = vmatprep.subr.mxu0 0.0
          %1606 = vmatpush1.msra.mxu0 0.0
          %1607 = vmatprep.subr.mxu0 0.0
          %1608 = vmatpush1.msra.mxu0 0.0
          %1609 = vmatprep.subr.mxu0 0.0
          %1610 = vmatpush1.msra.mxu0 0.0
          %1611 = vmatprep.subr.mxu0 0.0
          %1612 = vmatpush1.msra.mxu0 0.0
          %1613 = vmatprep.mubr.f32.mxu0 0.0
          %1614 = vmatmul.mubr.f32.gmra.mrb[0].mxu0 %v1498
          %v1615 = vpop.f32.mrb[0].mxu0
          %v1616 = vadd.f32 0.0, %v1615
          %v1617 = vpop.f32.mrb[0].mxu0
          %v1618 = vadd.f32 0.0, %v1617
          %1619 = vmatprep.mubr.f32.mxu0 0.0
          %1620 = vmatmul.mubr.f32.gmra.mrb[0].mxu0 %v1501
          %v1621 = vpop.f32.mrb[0].mxu0
          %v1622 = vadd.f32 0.0, %v1621
          %v1623 = vpop.f32.mrb[0].mxu0
          %v1624 = vadd.f32 0.0, %v1623
          %1625 = vmatprep.mubr.f32.mxu0 0.0
          %1626 = vmatmul.mubr.f32.gmra.mrb[0].mxu0 %v1504
          %v1627 = vpop.f32.mrb[0].mxu0
          %v1628 = vadd.f32 0.0, %v1627
          %v1629 = vpop.f32.mrb[0].mxu0
          %v1630 = vadd.f32 0.0, %v1629
          %1631 = vmatprep.mubr.f32.mxu0 0.0
          %1632 = vmatmul.mubr.f32.gmra.mrb[0].mxu0 %v1507
          %v1633 = vpop.f32.mrb[0].mxu0
          %v1634 = vadd.f32 0.0, %v1633
          %v1635 = vpop.f32.mrb[0].mxu0
          %v1636 = vadd.f32 0.0, %v1635
          %1637 = vmatprep.mubr.f32.mxu0 0.0
          %1638 = vmatmul.mubr.f32.gmra.mrb[0].mxu0 %v1510
          %v1639 = vpop.f32.mrb[0].mxu0
          %v1640 = vadd.f32 0.0, %v1639
          %v1641 = vpop.f32.mrb[0].mxu0
          %v1642 = vadd.f32 0.0, %v1641
          %1643 = vmatprep.mubr.f32.mxu0 0.0
          %1644 = vmatmul.mubr.f32.gmra.mrb[0].mxu0 %v1513
          %v1645 = vpop.f32.mrb[0].mxu0
          %v1646 = vadd.f32 0.0, %v1645
          %v1647 = vpop.f32.mrb[0].mxu0
          %v1648 = vadd.f32 0.0, %v1647
          %1649 = vmatprep.mubr.f32.mxu0 0.0
          %1650 = vmatmul.mubr.f32.gmra.mrb[0].mxu0 %v1516
          %v1651 = vpop.f32.mrb[0].mxu0
          %v1652 = vadd.f32 0.0, %v1651
          %v1653 = vpop.f32.mrb[0].mxu0
          %v1654 = vadd.f32 0.0, %v1653
          %1655 = vmatprep.mubr.f32.mxu0 0.0
          %1656 = vmatmul.mubr.f32.gmra.mrb[0].mxu0 %v1519
          %v1657 = vpop.f32.mrb[0].mxu0
          %v1658 = vadd.f32 0.0, %v1657
          %v1659 = vpop.f32.mrb[0].mxu0
          %v1660 = vadd.f32 0.0, %v1659
          %1661 = vmatprep.mubr.f32.mxu0 0.0
          %1662 = vmatmul.mubr.f32.gmra.mrb[0].mxu0 %v1522
          %v1663 = vpop.f32.mrb[0].mxu0
          %v1664 = vadd.f32 0.0, %v1663
          %v1665 = vpop.f32.mrb[0].mxu0
          %v1666 = vadd.f32 0.0, %v1665
          %1667 = vmatprep.mubr.f32.mxu0 0.0
          %1668 = vmatmul.mubr.f32.gmra.mrb[0].mxu0 %v1525
          %v1669 = vpop.f32.mrb[0].mxu0
          %v1670 = vadd.f32 0.0, %v1669
          %v1671 = vpop.f32.mrb[0].mxu0
          %v1672 = vadd.f32 0.0, %v1671
          %1673 = vmatprep.mubr.f32.mxu0 0.0
          %1674 = vmatmul.mubr.f32.gmra.mrb[0].mxu0 %v1528
          %v1675 = vpop.f32.mrb[0].mxu0
          %v1676 = vadd.f32 0.0, %v1675
          %v1677 = vpop.f32.mrb[0].mxu0
          %v1678 = vadd.f32 0.0, %v1677
          %1679 = vmatprep.mubr.f32.mxu0 0.0
          %1680 = vmatmul.mubr.f32.gmra.mrb[0].mxu0 %v1531
          %v1681 = vpop.f32.mrb[0].mxu0
          %v1682 = vadd.f32 0.0, %v1681
          %v1683 = vpop.f32.mrb[0].mxu0
          %v1684 = vadd.f32 0.0, %v1683
          %1685 = vmatprep.mubr.f32.mxu0 0.0
          %1686 = vmatmul.mubr.f32.gmra.mrb[0].mxu0 %v1534
          %v1687 = vpop.f32.mrb[0].mxu0
          %v1688 = vadd.f32 0.0, %v1687
          %v1689 = vpop.f32.mrb[0].mxu0
          %v1690 = vadd.f32 0.0, %v1689
          %1691 = vmatprep.mubr.f32.mxu0 0.0
          %1692 = vmatmul.mubr.f32.gmra.mrb[0].mxu0 %v1537
          %v1693 = vpop.f32.mrb[0].mxu0
          %v1694 = vadd.f32 0.0, %v1693
          %v1695 = vpop.f32.mrb[0].mxu0
          %v1696 = vadd.f32 0.0, %v1695
          %1697 = vmatprep.mubr.f32.mxu0 0.0
          %1698 = vmatmul.mubr.f32.gmra.mrb[0].mxu0 %v1540
          %v1699 = vpop.f32.mrb[0].mxu0
          %v1700 = vadd.f32 0.0, %v1699
          %v1701 = vpop.f32.mrb[0].mxu0
          %v1702 = vadd.f32 0.0, %v1701
          %1703 = vmatprep.mubr.f32.mxu0 0.0
          %1704 = vmatmul.mubr.f32.gmra.mrb[0].mxu0 %v1543
          %v1705 = vpop.f32.mrb[0].mxu0
          %v1706 = vadd.f32 0.0, %v1705
          %v1707 = vpop.f32.mrb[0].mxu0
          %v1708 = vadd.f32 0.0, %v1707
          %1709 = vdwg.mxu0
          %v1710 = vadd.f32 %v1443, %v1616
          %v1711 = vadd.f32 %v1444, %v1618
          %v1712 = vadd.f32 %v1445, %v1622
          %v1713 = vadd.f32 %v1446, %v1624
          %v1714 = vadd.f32 %v1447, %v1628
          %v1715 = vadd.f32 %v1448, %v1630
          %v1716 = vadd.f32 %v1449, %v1634
          %v1717 = vadd.f32 %v1450, %v1636
          %v1718 = vadd.f32 %v1451, %v1640
          %v1719 = vadd.f32 %v1452, %v1642
          %v1720 = vadd.f32 %v1453, %v1646
          %v1721 = vadd.f32 %v1454, %v1648
          %v1722 = vadd.f32 %v1455, %v1652
          %v1723 = vadd.f32 %v1456, %v1654
          %v1724 = vadd.f32 %v1457, %v1658
          %v1725 = vadd.f32 %v1458, %v1660
          %v1726 = vadd.f32 %v1459, %v1664
          %v1727 = vadd.f32 %v1460, %v1666
          %v1728 = vadd.f32 %v1461, %v1670
          %v1729 = vadd.f32 %v1462, %v1672
          %v1730 = vadd.f32 %v1463, %v1676
          %v1731 = vadd.f32 %v1464, %v1678
          %v1732 = vadd.f32 %v1465, %v1682
          %v1733 = vadd.f32 %v1466, %v1684
          %v1734 = vadd.f32 %v1467, %v1688
          %v1735 = vadd.f32 %v1468, %v1690
          %v1736 = vadd.f32 %v1469, %v1694
          %v1737 = vadd.f32 %v1470, %v1696
          %v1738 = vadd.f32 %v1471, %v1700
          %v1739 = vadd.f32 %v1472, %v1702
          %v1740 = vadd.f32 %v1473, %v1706
          %v1741 = vadd.f32 %v1474, %v1708
          %v1742 = vld [vmem:[%s3] sm:$0x3]
          %v1744 = vlaneseq
          %v1745 = vshrl.u32 %v1744, 7
          %v1746 = vsub.s32 0, %v1745
          %v1747 = vrot.slane %v1742, %v1746
          %v1748 = vlaneseq
          %v1749 = vshrl.u32 %v1748, 7
          %v1750 = vsub.s32 1, %v1749
          %v1751 = vrot.slane %v1742, %v1750
          %v1754 = vadd.f32 %v1710, %v1747
          %v1755 = vadd.f32 %v1711, %v1751
          %v1756 = vadd.f32 %v1712, %v1747
          %v1757 = vadd.f32 %v1713, %v1751
          %v1758 = vadd.f32 %v1714, %v1747
          %v1759 = vadd.f32 %v1715, %v1751
          %v1760 = vadd.f32 %v1716, %v1747
          %v1761 = vadd.f32 %v1717, %v1751
          %v1762 = vadd.f32 %v1718, %v1747
          %v1763 = vadd.f32 %v1719, %v1751
          %v1764 = vadd.f32 %v1720, %v1747
          %v1765 = vadd.f32 %v1721, %v1751
          %v1766 = vadd.f32 %v1722, %v1747
          %v1767 = vadd.f32 %v1723, %v1751
          %v1768 = vadd.f32 %v1724, %v1747
          %v1769 = vadd.f32 %v1725, %v1751
          %v1770 = vadd.f32 %v1726, %v1747
          %v1771 = vadd.f32 %v1727, %v1751
          %v1772 = vadd.f32 %v1728, %v1747
          %v1773 = vadd.f32 %v1729, %v1751
          %v1774 = vadd.f32 %v1730, %v1747
          %v1775 = vadd.f32 %v1731, %v1751
          %v1776 = vadd.f32 %v1732, %v1747
          %v1777 = vadd.f32 %v1733, %v1751
          %v1778 = vadd.f32 %v1734, %v1747
          %v1779 = vadd.f32 %v1735, %v1751
          %v1780 = vadd.f32 %v1736, %v1747
          %v1781 = vadd.f32 %v1737, %v1751
          %v1782 = vadd.f32 %v1738, %v1747
          %v1783 = vadd.f32 %v1739, %v1751
          %v1784 = vadd.f32 %v1740, %v1747
          %v1785 = vadd.f32 %v1741, %v1751
          %v1786 = vxor.u32 %v1754, 2147483648
          %v1787 = vxor.u32 %v1756, 2147483648
          %v1788 = vxor.u32 %v1758, 2147483648
          %v1789 = vxor.u32 %v1760, 2147483648
          %v1790 = vxor.u32 %v1762, 2147483648
          %v1791 = vxor.u32 %v1764, 2147483648
          %v1792 = vxor.u32 %v1766, 2147483648
          %v1793 = vxor.u32 %v1768, 2147483648
          %v1794 = vxor.u32 %v1770, 2147483648
          %v1795 = vxor.u32 %v1772, 2147483648
          %v1796 = vxor.u32 %v1774, 2147483648
          %v1797 = vxor.u32 %v1776, 2147483648
          %v1798 = vxor.u32 %v1778, 2147483648
          %v1799 = vxor.u32 %v1780, 2147483648
          %v1800 = vxor.u32 %v1782, 2147483648
          %v1801 = vxor.u32 %v1784, 2147483648
          %v1802 = vmul.f32 %v1786, 1.442695
          %v1803 = vpow.pop %v1802
          %v1804 = vmul.f32 %v1787, 1.442695
          %v1805 = vpow.pop %v1804
          %v1806 = vmul.f32 %v1788, 1.442695
          %v1807 = vpow.pop %v1806
          %v1808 = vmul.f32 %v1789, 1.442695
          %v1809 = vpow.pop %v1808
          %v1810 = vmul.f32 %v1790, 1.442695
          %v1811 = vpow.pop %v1810
          %v1812 = vmul.f32 %v1791, 1.442695
          %v1813 = vpow.pop %v1812
          %v1814 = vmul.f32 %v1792, 1.442695
          %v1815 = vpow.pop %v1814
          %v1816 = vmul.f32 %v1793, 1.442695
          %v1817 = vpow.pop %v1816
          %v1818 = vmul.f32 %v1794, 1.442695
          %v1819 = vpow.pop %v1818
          %v1820 = vmul.f32 %v1795, 1.442695
          %v1821 = vpow.pop %v1820
          %v1822 = vmul.f32 %v1796, 1.442695
          %v1823 = vpow.pop %v1822
          %v1824 = vmul.f32 %v1797, 1.442695
          %v1825 = vpow.pop %v1824
          %v1826 = vmul.f32 %v1798, 1.442695
          %v1827 = vpow.pop %v1826
          %v1828 = vmul.f32 %v1799, 1.442695
          %v1829 = vpow.pop %v1828
          %v1830 = vmul.f32 %v1800, 1.442695
          %v1831 = vpow.pop %v1830
          %v1832 = vmul.f32 %v1801, 1.442695
          %v1833 = vpow.pop %v1832
          %v1834 = vadd.f32 %v1803, 1.0
          %v1835 = vadd.f32 %v1805, 1.0
          %v1836 = vadd.f32 %v1807, 1.0
          %v1837 = vadd.f32 %v1809, 1.0
          %v1838 = vadd.f32 %v1811, 1.0
          %v1839 = vadd.f32 %v1813, 1.0
          %v1840 = vadd.f32 %v1815, 1.0
          %v1841 = vadd.f32 %v1817, 1.0
          %v1842 = vadd.f32 %v1819, 1.0
          %v1843 = vadd.f32 %v1821, 1.0
          %v1844 = vadd.f32 %v1823, 1.0
          %v1845 = vadd.f32 %v1825, 1.0
          %v1846 = vadd.f32 %v1827, 1.0
          %v1847 = vadd.f32 %v1829, 1.0
          %v1848 = vadd.f32 %v1831, 1.0
          %v1849 = vadd.f32 %v1833, 1.0
          %v1850 = vrcp.pop %v1834
          %v1851 = vmul.f32 1.0, %v1850
          %v1852 = vrcp.pop %v1835
          %v1853 = vmul.f32 1.0, %v1852
          %v1854 = vrcp.pop %v1836
          %v1855 = vmul.f32 1.0, %v1854
          %v1856 = vrcp.pop %v1837
          %v1857 = vmul.f32 1.0, %v1856
          %v1858 = vrcp.pop %v1838
          %v1859 = vmul.f32 1.0, %v1858
          %v1860 = vrcp.pop %v1839
          %v1861 = vmul.f32 1.0, %v1860
          %v1862 = vrcp.pop %v1840
          %v1863 = vmul.f32 1.0, %v1862
          %v1864 = vrcp.pop %v1841
          %v1865 = vmul.f32 1.0, %v1864
          %v1866 = vrcp.pop %v1842
          %v1867 = vmul.f32 1.0, %v1866
          %v1868 = vrcp.pop %v1843
          %v1869 = vmul.f32 1.0, %v1868
          %v1870 = vrcp.pop %v1844
          %v1871 = vmul.f32 1.0, %v1870
          %v1872 = vrcp.pop %v1845
          %v1873 = vmul.f32 1.0, %v1872
          %v1874 = vrcp.pop %v1846
          %v1875 = vmul.f32 1.0, %v1874
          %v1876 = vrcp.pop %v1847
          %v1877 = vmul.f32 1.0, %v1876
          %v1878 = vrcp.pop %v1848
          %v1879 = vmul.f32 1.0, %v1878
          %v1880 = vrcp.pop %v1849
          %v1881 = vmul.f32 1.0, %v1880
          %v1882 = vtanh.pop %v1755
          %v1883 = vtanh.pop %v1757
          %v1884 = vtanh.pop %v1759
          %v1885 = vtanh.pop %v1761
          %v1886 = vtanh.pop %v1763
          %v1887 = vtanh.pop %v1765
          %v1888 = vtanh.pop %v1767
          %v1889 = vtanh.pop %v1769
          %v1890 = vtanh.pop %v1771
          %v1891 = vtanh.pop %v1773
          %v1892 = vtanh.pop %v1775
          %v1893 = vtanh.pop %v1777
          %v1894 = vtanh.pop %v1779
          %v1895 = vtanh.pop %v1781
          %v1896 = vtanh.pop %v1783
          %v1897 = vtanh.pop %v1785
          %v1898 = vsub.f32 1.0, %v1851
          %v1899 = vsub.f32 1.0, %v1853
          %v1900 = vsub.f32 1.0, %v1855
          %v1901 = vsub.f32 1.0, %v1857
          %v1902 = vsub.f32 1.0, %v1859
          %v1903 = vsub.f32 1.0, %v1861
          %v1904 = vsub.f32 1.0, %v1863
          %v1905 = vsub.f32 1.0, %v1865
          %v1906 = vsub.f32 1.0, %v1867
          %v1907 = vsub.f32 1.0, %v1869
          %v1908 = vsub.f32 1.0, %v1871
          %v1909 = vsub.f32 1.0, %v1873
          %v1910 = vsub.f32 1.0, %v1875
          %v1911 = vsub.f32 1.0, %v1877
          %v1912 = vsub.f32 1.0, %v1879
          %v1913 = vsub.f32 1.0, %v1881
          %v1914 = vmul.f32 %v1898, %v1882
          %v1915 = vmul.f32 %v1899, %v1883
          %v1916 = vmul.f32 %v1900, %v1884
          %v1917 = vmul.f32 %v1901, %v1885
          %v1918 = vmul.f32 %v1902, %v1886
          %v1919 = vmul.f32 %v1903, %v1887
          %v1920 = vmul.f32 %v1904, %v1888
          %v1921 = vmul.f32 %v1905, %v1889
          %v1922 = vmul.f32 %v1906, %v1890
          %v1923 = vmul.f32 %v1907, %v1891
          %v1924 = vmul.f32 %v1908, %v1892
          %v1925 = vmul.f32 %v1909, %v1893
          %v1926 = vmul.f32 %v1910, %v1894
          %v1927 = vmul.f32 %v1911, %v1895
          %v1928 = vmul.f32 %v1912, %v1896
          %v1929 = vmul.f32 %v1913, %v1897
          %v1930 = vmax.f32 %v1914, 0.0
          %v1931 = vmax.f32 %v1915, 0.0
          %v1932 = vmax.f32 %v1916, 0.0
          %v1933 = vmax.f32 %v1917, 0.0
          %v1934 = vmax.f32 %v1918, 0.0
          %v1935 = vmax.f32 %v1919, 0.0
          %v1936 = vmax.f32 %v1920, 0.0
          %v1937 = vmax.f32 %v1921, 0.0
          %v1938 = vmax.f32 %v1922, 0.0
          %v1939 = vmax.f32 %v1923, 0.0
          %v1940 = vmax.f32 %v1924, 0.0
          %v1941 = vmax.f32 %v1925, 0.0
          %v1942 = vmax.f32 %v1926, 0.0
          %v1943 = vmax.f32 %v1927, 0.0
          %v1944 = vmax.f32 %v1928, 0.0
          %v1945 = vmax.f32 %v1929, 0.0
          %1946 = vxpose.xlu0.b32.start [1/16] %v1930, 128
          %1947 = vxpose.xlu0.b32.cont [2/16] %v1931, 128
          %1948 = vxpose.xlu0.b32.cont [3/16] %v1932, 128
          %1949 = vxpose.xlu0.b32.cont [4/16] %v1933, 128
          %1950 = vxpose.xlu0.b32.cont [5/16] %v1934, 128
          %1951 = vxpose.xlu0.b32.cont [6/16] %v1935, 128
          %1952 = vxpose.xlu0.b32.cont [7/16] %v1936, 128
          %1953 = vxpose.xlu0.b32.cont [8/16] %v1937, 128
          %1954 = vxpose.xlu0.b32.cont [9/16] %v1938, 128
          %1955 = vxpose.xlu0.b32.cont [10/16] %v1939, 128
          %1956 = vxpose.xlu0.b32.cont [11/16] %v1940, 128
          %1957 = vxpose.xlu0.b32.cont [12/16] %v1941, 128
          %1958 = vxpose.xlu0.b32.cont [13/16] %v1942, 128
          %1959 = vxpose.xlu0.b32.cont [14/16] %v1943, 128
          %1960 = vxpose.xlu0.b32.cont [15/16] %v1944, 128
          %1961 = vxpose.xlu0.b32.end [16/16] %v1945, 128
          %v1962 = vpop.trf.xlu0
          %v1963 = vpop.trf.xlu0
          %v1964 = vpop.trf.xlu0
          %v1965 = vpop.trf.xlu0
          %v1966 = vpop.trf.xlu0
          %v1967 = vpop.trf.xlu0
          %v1968 = vpop.trf.xlu0
          %v1969 = vpop.trf.xlu0
          %v1970 = vpop.trf.xlu0
          %v1971 = vpop.trf.xlu0
          %v1972 = vpop.trf.xlu0
          %v1973 = vpop.trf.xlu0
          %v1974 = vpop.trf.xlu0
          %v1975 = vpop.trf.xlu0
          %v1976 = vpop.trf.xlu0
          %v1977 = vpop.trf.xlu0
          %v1978 = vld [vmem:[%s4] sm:$0xff]
          %v1979 = vld [vmem:[%s4 + $0x8] sm:$0xff]
          %v1980 = vld [vmem:[%s4 + $0x10] sm:$0xff]
          %v1981 = vld [vmem:[%s4 + $0x18] sm:$0xff]
          %v1982 = vld [vmem:[%s4 + $0x20] sm:$0xff]
          %v1983 = vld [vmem:[%s4 + $0x28] sm:$0xff]
          %v1984 = vld [vmem:[%s4 + $0x30] sm:$0xff]
          %v1985 = vld [vmem:[%s4 + $0x38] sm:$0xff]
          %v1986 = vld [vmem:[%s4 + $0x40] sm:$0xff]
          %v1987 = vld [vmem:[%s4 + $0x48] sm:$0xff]
          %v1988 = vld [vmem:[%s4 + $0x50] sm:$0xff]
          %v1989 = vld [vmem:[%s4 + $0x58] sm:$0xff]
          %v1990 = vld [vmem:[%s4 + $0x60] sm:$0xff]
          %v1991 = vld [vmem:[%s4 + $0x68] sm:$0xff]
          %v1992 = vld [vmem:[%s4 + $0x70] sm:$0xff]
          %v1993 = vld [vmem:[%s4 + $0x78] sm:$0xff]
          %1995 = vset.pattern.permute.xlu0 0
          %1996 = vperm.xlu0 %1995, %v1978
          %v1997 = vpop.permute.xlu0 %1996
          %2000 = vset.pattern.permute.xlu0 0
          %2001 = vperm.xlu0 %2000, %v1979
          %v2002 = vpop.permute.xlu0 %2001
          %2005 = vset.pattern.permute.xlu0 0
          %2006 = vperm.xlu0 %2005, %v1980
          %v2007 = vpop.permute.xlu0 %2006
          %2010 = vset.pattern.permute.xlu0 0
          %2011 = vperm.xlu0 %2010, %v1981
          %v2012 = vpop.permute.xlu0 %2011
          %2015 = vset.pattern.permute.xlu0 0
          %2016 = vperm.xlu0 %2015, %v1982
          %v2017 = vpop.permute.xlu0 %2016
          %2020 = vset.pattern.permute.xlu0 0
          %2021 = vperm.xlu0 %2020, %v1983
          %v2022 = vpop.permute.xlu0 %2021
          %2025 = vset.pattern.permute.xlu0 0
          %2026 = vperm.xlu0 %2025, %v1984
          %v2027 = vpop.permute.xlu0 %2026
          %2030 = vset.pattern.permute.xlu0 0
          %2031 = vperm.xlu0 %2030, %v1985
          %v2032 = vpop.permute.xlu0 %2031
          %2035 = vset.pattern.permute.xlu0 0
          %2036 = vperm.xlu0 %2035, %v1986
          %v2037 = vpop.permute.xlu0 %2036
          %2040 = vset.pattern.permute.xlu0 0
          %2041 = vperm.xlu0 %2040, %v1987
          %v2042 = vpop.permute.xlu0 %2041
          %2045 = vset.pattern.permute.xlu0 0
          %2046 = vperm.xlu0 %2045, %v1988
          %v2047 = vpop.permute.xlu0 %2046
          %2050 = vset.pattern.permute.xlu0 0
          %2051 = vperm.xlu0 %2050, %v1989
          %v2052 = vpop.permute.xlu0 %2051
          %2055 = vset.pattern.permute.xlu0 0
          %2056 = vperm.xlu0 %2055, %v1990
          %v2057 = vpop.permute.xlu0 %2056
          %2060 = vset.pattern.permute.xlu0 0
          %2061 = vperm.xlu0 %2060, %v1991
          %v2062 = vpop.permute.xlu0 %2061
          %2065 = vset.pattern.permute.xlu0 0
          %2066 = vperm.xlu0 %2065, %v1992
          %v2067 = vpop.permute.xlu0 %2066
          %2070 = vset.pattern.permute.xlu0 0
          %2071 = vperm.xlu0 %2070, %v1993
          %v2072 = vpop.permute.xlu0 %2071
          %v2074 = vmul.f32 %v1962, %v1997
          %v2075 = vmul.f32 %v1963, %v2002
          %v2076 = vmul.f32 %v1964, %v2007
          %v2077 = vmul.f32 %v1965, %v2012
          %v2078 = vmul.f32 %v1966, %v2017
          %v2079 = vmul.f32 %v1967, %v2022
          %v2080 = vmul.f32 %v1968, %v2027
          %v2081 = vmul.f32 %v1969, %v2032
          %v2082 = vmul.f32 %v1970, %v2037
          %v2083 = vmul.f32 %v1971, %v2042
          %v2084 = vmul.f32 %v1972, %v2047
          %v2085 = vmul.f32 %v1973, %v2052
          %v2086 = vmul.f32 %v1974, %v2057
          %v2087 = vmul.f32 %v1975, %v2062
          %v2088 = vmul.f32 %v1976, %v2067
          %v2089 = vmul.f32 %v1977, %v2072
          %v2090 = vadd.f32 %v2074, %v2075
          %v2091 = vadd.f32 %v2090, %v2076
          %v2092 = vadd.f32 %v2091, %v2077
          %v2093 = vadd.f32 %v2092, %v2078
          %v2094 = vadd.f32 %v2093, %v2079
          %v2095 = vadd.f32 %v2094, %v2080
          %v2096 = vadd.f32 %v2095, %v2081
          %v2097 = vadd.f32 %v2096, %v2082
          %v2098 = vadd.f32 %v2097, %v2083
          %v2099 = vadd.f32 %v2098, %v2084
          %v2100 = vadd.f32 %v2099, %v2085
          %v2101 = vadd.f32 %v2100, %v2086
          %v2102 = vadd.f32 %v2101, %v2087
          %v2103 = vadd.f32 %v2102, %v2088
          %v2104 = vadd.f32 %v2103, %v2089
          %v2105 = vrot.slane %v2104, 4
          %v2106 = vadd.f32 %v2104, %v2105
          %v2107 = vrot.slane %v2106, 2
          %v2108 = vadd.f32 %v2106, %v2107
          %v2109 = vrot.slane %v2108, 1
          %v2110 = vadd.f32 %v2108, %v2109
          %v2111 = vld [vmem:[#allocation3] sm:$0x1]
          %2113 = vset.pattern.permute.xlu0 0
          %2114 = vperm.xlu0 %2113, %v2111
          %v2115 = vpop.permute.xlu0 %2114
          %v2117 = vlaneseq
          %v2118 = vshrl.u32 %v2117, 7
          %v2119 = vsub.s32 0, %v2118
          %v2120 = vrot.slane %v2115, %v2119
          %v2121 = vadd.f32 %v2110, %v2120
          %2122 = vst [vmem:[#allocation4] sm:$0x1] %v2121
        $region56: #{tpu_custom_call.1} parent=43 // pred_fallthru
          _
        // Predicated region
        $region57: #{tpu_custom_call.1} parent=43 // pred_check
          %p2123 = pneg %p181
        $region58: #{tpu_custom_call.1} parent=43 // pred_check_branch
          %2125 = sbr.rel (%p2123) target = $region60
        $region59: #{tpu_custom_call.1} parent=43 // pred_region
          %s2127 = ssub.s32 16, 16
          %2128 = vsyncadd [#allocation5], %s2127
          %s2129 = smul.addr %s25, 16
          %s2130 = scalar_lea.hbm %s6, %s2129
          %s2132 = sshll.u32 [#allocation4], 4
          %s2133 = int_to_ptr.vmem [resolvable:$true] %s2132
          %2135 = dma.vmem_to_hbm [thread:$0]  %s2133, 16, %s2130, [#allocation5]
        $region60: #{tpu_custom_call.1} parent=43 // pred_fallthru
          _
        // Predicated region
        $region61: #{tpu_custom_call.1} parent=43 // pred_check
          %p2136 = pneg %p181
        $region62: #{tpu_custom_call.1} parent=43 // pred_check_branch
          %2138 = sbr.rel (%p2136) target = $region64
        $region63: #{tpu_custom_call.1} parent=43 // pred_region
          %2139 = dma.done [#allocation5], 16
        $region64: #{tpu_custom_call.1} parent=43 // pred_fallthru
          _
      $region44: #{tpu_custom_call.1} parent=5 // pred_fallthru
        _
      %p2140 = scmp.le.s32.totalorder 2, %s15
      // Predicated region
      $region65: #{tpu_custom_call.1} parent=5 // pred_check
        %p2141 = pneg %p2140
      $region66: #{tpu_custom_call.1} parent=5 // pred_check_branch
        %2143 = sbr.rel (%p2141) target = $region68
      $region67: #{tpu_custom_call.1} parent=5 // pred_region
        %s2144 = ssub.s32 %s15, 2
      $region68: #{tpu_custom_call.1} parent=5 // pred_fallthru
        _
    $region6: #{tpu_custom_call.1} parent=1 // loop_footer
      %s19 = sadd.s32 1, %s15
    $region7: #{tpu_custom_call.1} parent=1 // loop_footer_branch
      %14 = sbr.rel target = $region3
    $region8: #{tpu_custom_call.1} parent=1 // loop_exit
      _
    %2145 = vsyncpa [#allocation5], 1
    %s2146 = scalar_lea.sflag [#allocation5], 1
    %2147 = vsyncpa %s2146, 1

</llo_original>
